<compile_context>
chip_gen: v7x
topology: tpu7x:2x2x1
jax: 0.10.0
libtpu: 0.0.40
codegen_flags: <defaults>
</compile_context>

<pallas_src>
import jax
import jax.numpy as jnp
from jax.experimental import pallas as pl
from jax.experimental.pallas import tpu as pltpu


IN_FEATURES = 28 * 28          # 784, fixed by x.view(-1, 28*28) in the spec
LANE = 128
SUBLANE = 8


def _round_up(x, m):
    return ((x + m - 1) // m) * m


def _pick_row_tiling(m):
    """Row padding / tile: sublane-aligned rows, bm capped at the MXU row count,
    and at least two row tiles so both v7x TensorCores get work."""
    mp = _round_up(max(m, SUBLANE), SUBLANE)
    bm = min(256, mp)
    while mp % bm:
        bm -= SUBLANE
    if mp // bm < 2:
        if bm >= 2 * SUBLANE and (bm // 2) % SUBLANE == 0:
            bm //= 2
        else:
            mp += bm          # add one all-zero row tile
    return mp, bm


def _stacked_mlp_kernel(x_ref, w1_ref, b1_ref, w2_ref, b2_ref, w3_ref, b3_ref,
                        o_ref, xs_ref):
    """One grid step = one NeuralNet block applied to one batch-row tile.

    Grid = (batch_tiles, num_layers).  The activation for the current batch
    tile lives in the VMEM scratch `xs_ref` across the layer axis; HBM is
    touched only for the streamed layer weights, the initial x tile and the
    final output tile.
    """
    layer = pl.program_id(1)

    @pl.when(layer == 0)
    def _():
        xs_ref[...] = x_ref[...]

    # linear1 + ReLU : (bm, INP) @ (INP, H1), f32 accumulation
    h = jnp.dot(xs_ref[...].astype(jnp.bfloat16), w1_ref[...],
                preferred_element_type=jnp.float32)
    h = jnp.maximum(h + b1_ref[...], 0.0)
    # linear2 + ReLU : (bm, H1) @ (H1, H2)
    h = jnp.dot(h.astype(jnp.bfloat16), w2_ref[...],
                preferred_element_type=jnp.float32)
    h = jnp.maximum(h + b2_ref[...], 0.0)
    # linear3 (no ReLU) : (bm, H2) @ (H2, INP)
    y = jnp.dot(h.astype(jnp.bfloat16), w3_ref[...],
                preferred_element_type=jnp.float32)
    y = y + b3_ref[...]

    xs_ref[...] = y            # carry the activation to the next layer step

    @pl.when(layer == pl.num_programs(1) - 1)
    def _():
        o_ref[...] = y.astype(o_ref.dtype)


def prepare_stacked_params(layer_params):
    """Stack per-layer params, zero-pad the 784-wide dims to 896 (lane-dense)
    and cast weights to bf16.  Zero-padded weight rows/cols and bias entries
    contribute nothing, so the math is unchanged."""
    inp = _round_up(IN_FEATURES, LANE)                       # 896
    pad = inp - IN_FEATURES
    w1 = jnp.stack([p["w1"] for p in layer_params])          # (L, 784, H1)
    w2 = jnp.stack([p["w2"] for p in layer_params])          # (L, H1, H2)
    w3 = jnp.stack([p["w3"] for p in layer_params])          # (L, H2, 784)
    b1 = jnp.stack([p["b1"] for p in layer_params])[:, None, :]
    b2 = jnp.stack([p["b2"] for p in layer_params])[:, None, :]
    b3 = jnp.stack([p["b3"] for p in layer_params])[:, None, :]
    w1 = jnp.pad(w1, ((0, 0), (0, pad), (0, 0))).astype(jnp.bfloat16)
    w2 = w2.astype(jnp.bfloat16)
    w3 = jnp.pad(w3, ((0, 0), (0, 0), (0, pad))).astype(jnp.bfloat16)
    b3 = jnp.pad(b3, ((0, 0), (0, 0), (0, pad)))
    return w1, b1.astype(jnp.float32), w2, b2.astype(jnp.float32), w3, b3.astype(jnp.float32)


@jax.jit
def sequential_layers_forward(x, stacked):
    """SequentialLayersGeneration.forward: the whole layer stack in one kernel."""
    w1, b1, w2, b2, w3, b3 = stacked
    num_layers, inp, h1 = w1.shape
    h2 = w2.shape[-1]

    x2 = x.reshape(-1, IN_FEATURES).astype(jnp.float32)
    m = x2.shape[0]
    mp, bm = _pick_row_tiling(m)
    x_pad = jnp.pad(x2, ((0, mp - m), (0, inp - IN_FEATURES)))

    grid = (mp // bm, num_layers)

    # Explicit VMEM budget: double-buffered bf16 weight blocks dominate; keep
    # the total well under the smallest scoped default (v5e: 16 MiB).
    w_bytes = (inp * h1 + h1 * h2 + h2 * inp) * 2            # bf16, per layer
    act_bytes = bm * inp * 4                                  # f32 row tile
    assert 2 * w_bytes + 5 * act_bytes < 16 * 1024 * 1024

    cost = pl.CostEstimate(
        flops=2 * mp * num_layers * (inp * h1 + h1 * h2 + h2 * inp),
        transcendentals=0,
        bytes_accessed=(num_layers * w_bytes
                        + num_layers * (h1 + h2 + inp) * 4
                        + 2 * mp * inp * 4),
    )

    out = pl.pallas_call(
        _stacked_mlp_kernel,
        out_shape=jax.ShapeDtypeStruct((mp, inp), jnp.float32),
        grid=grid,
        in_specs=[
            pl.BlockSpec((bm, inp), lambda i, l: (i, 0)),            # x tile
            pl.BlockSpec((None, inp, h1), lambda i, l: (l, 0, 0)),   # w1 (bf16)
            pl.BlockSpec((None, 1, h1), lambda i, l: (l, 0, 0)),     # b1
            pl.BlockSpec((None, h1, h2), lambda i, l: (l, 0, 0)),    # w2 (bf16)
            pl.BlockSpec((None, 1, h2), lambda i, l: (l, 0, 0)),     # b2
            pl.BlockSpec((None, h2, inp), lambda i, l: (l, 0, 0)),   # w3 (bf16)
            pl.BlockSpec((None, 1, inp), lambda i, l: (l, 0, 0)),    # b3
        ],
        out_specs=pl.BlockSpec((bm, inp), lambda i, l: (i, 0)),
        scratch_shapes=[pltpu.VMEM((bm, inp), jnp.float32)],
        compiler_params=pltpu.CompilerParams(
            dimension_semantics=("parallel", "arbitrary")),
        cost_estimate=cost,
    )(x_pad, w1, b1, w2, b2, w3, b3)

    return out[:m, :IN_FEATURES]


def init_params(key, input_size, hidden_size_1, hidden_size_2, num_layers):
    """PyTorch-nn.Linear-style uniform(-1/sqrt(fan_in), 1/sqrt(fan_in)) init,
    weights stored as (in_features, out_features)."""

    def make_linear(kw, kb, fan_in, fan_out):
        s = float(fan_in) ** -0.5
        w = jax.random.uniform(kw, (fan_in, fan_out), jnp.float32, -s, s)
        b = jax.random.uniform(kb, (fan_out,), jnp.float32, -s, s)
        return w, b

    layers = []
    for _ in range(num_layers):
        key, k1, k2, k3, k4, k5, k6 = jax.random.split(key, 7)
        w1, b1 = make_linear(k1, k2, input_size, hidden_size_1)
        w2, b2 = make_linear(k3, k4, hidden_size_1, hidden_size_2)
        w3, b3 = make_linear(k5, k6, hidden_size_2, input_size)
        layers.append(dict(w1=w1, b1=b1, w2=w2, b2=b2, w3=w3, b3=b3))
    return layers


def reference_forward(x, layer_params):
    """Pure-JAX reference with the same numerics the kernel uses
    (bf16 matmul inputs, f32 accumulation, f32 bias/ReLU)."""
    h = x.reshape(-1, IN_FEATURES).astype(jnp.float32)
    for p in layer_params:
        h = jnp.maximum(
            jnp.dot(h.astype(jnp.bfloat16), p["w1"].astype(jnp.bfloat16),
                    preferred_element_type=jnp.float32) + p["b1"], 0.0)
        h = jnp.maximum(
            jnp.dot(h.astype(jnp.bfloat16), p["w2"].astype(jnp.bfloat16),
                    preferred_element_type=jnp.float32) + p["b2"], 0.0)
        h = jnp.dot(h.astype(jnp.bfloat16), p["w3"].astype(jnp.bfloat16),
                    preferred_element_type=jnp.float32) + p["b3"]
    return h


if __name__ == "__main__":
    # Small deterministic setup consistent with the module's forward
    # (x.view(-1, 28*28) forces input_size = 784).
    input_size = IN_FEATURES
    hidden_size_1, hidden_size_2 = 128, 256
    number_of_layers = 2
    batch = 4

    key = jax.random.PRNGKey(0)
    k_x, k_p = jax.random.split(key)
    x = jax.random.normal(k_x, (batch, 1, 28, 28), dtype=jnp.float32)
    params = init_params(k_p, input_size, hidden_size_1, hidden_size_2,
                         number_of_layers)

    stacked = prepare_stacked_params(params)
    out = sequential_layers_forward(x, stacked)
    out = jax.block_until_ready(out)

    ref = reference_forward(x, params)

    assert out.shape == (batch, input_size)
    assert out.dtype == jnp.float32
    assert jnp.allclose(out, ref, atol=2e-3, rtol=2e-3), (
        "mismatch vs reference, max abs err = "
        f"{float(jnp.max(jnp.abs(out - ref)))}")

    print("KERNEL_OK")
</pallas_src>

<mosaic_0001>
module attributes {stable_mosaic.version = 11 : i64} {
  func.func @_stacked_mlp_kernel(%arg0: i32, %arg1: i32, %arg2: memref<8x896xf32, #tpu.memory_space<vmem>>, %arg3: memref<1x896x128xbf16, #tpu.memory_space<vmem>>, %arg4: memref<1x1x128xf32, #tpu.memory_space<vmem>>, %arg5: memref<1x128x256xbf16, #tpu.memory_space<vmem>>, %arg6: memref<1x1x256xf32, #tpu.memory_space<vmem>>, %arg7: memref<1x256x896xbf16, #tpu.memory_space<vmem>>, %arg8: memref<1x1x896xf32, #tpu.memory_space<vmem>>, %arg9: memref<8x896xf32, #tpu.memory_space<vmem>>, %arg10: memref<8x896xf32, #tpu.memory_space<vmem>>) attributes {dimension_semantics = [#tpu.dimension_semantics<parallel>, #tpu.dimension_semantics<arbitrary>], iteration_bounds = array<i64: 2, 2>, scalar_prefetch = 0 : i64, scratch_operands = 1 : i64, tpu.core_type = #tpu.core_type<tc>, window_params = [{transform_indices = @transform_0, window_bounds = array<i64: 8, 896>}, {transform_indices = @transform_1, window_bounds = array<i64: 1, 896, 128>}, {transform_indices = @transform_2, window_bounds = array<i64: 1, 1, 128>}, {transform_indices = @transform_3, window_bounds = array<i64: 1, 128, 256>}, {transform_indices = @transform_4, window_bounds = array<i64: 1, 1, 256>}, {transform_indices = @transform_5, window_bounds = array<i64: 1, 256, 896>}, {transform_indices = @transform_6, window_bounds = array<i64: 1, 1, 896>}, {transform_indices = @transform_7, window_bounds = array<i64: 8, 896>}]} {
    %c0_i32 = arith.constant 0 : i32
    %0 = arith.cmpi eq, %arg1, %c0_i32 : i32
    %1 = arith.extui %0 : i1 to i32
    %c0_i32_0 = arith.constant 0 : i32
    %2 = arith.cmpi ne, %1, %c0_i32_0 : i32
    scf.if %2 {
      %c0_27 = arith.constant 0 : index
      %c0_28 = arith.constant 0 : index
      %36 = vector.load %arg2[%c0_27, %c0_28] : memref<8x896xf32, #tpu.memory_space<vmem>>, vector<8x896xf32>
      %c0_29 = arith.constant 0 : index
      %c0_30 = arith.constant 0 : index
      %37 = vector.load %arg10[%c0_29, %c0_30] : memref<8x896xf32, #tpu.memory_space<vmem>>, vector<8x896xf32>
      tpu.vector_store %arg10[%c0_29, %c0_30], %36 {strides = array<i32>} : memref<8x896xf32, #tpu.memory_space<vmem>>, vector<8x896xf32>,
    } else {
    }
    %c0 = arith.constant 0 : index
    %c0_1 = arith.constant 0 : index
    %3 = vector.load %arg10[%c0, %c0_1] : memref<8x896xf32, #tpu.memory_space<vmem>>, vector<8x896xf32>
    %4 = arith.truncf %3 : vector<8x896xf32> to vector<8x896xbf16>
    %c0_2 = arith.constant 0 : index
    %c0_3 = arith.constant 0 : index
    %c0_4 = arith.constant 0 : index
    %5 = vector.load %arg3[%c0_2, %c0_3, %c0_4] : memref<1x896x128xbf16, #tpu.memory_space<vmem>>, vector<1x896x128xbf16>
    %6 = vector.shape_cast %5 : vector<1x896x128xbf16> to vector<896x128xbf16>
    %cst = arith.constant dense<0.000000e+00> : vector<8x128xf32>
    %7 = tpu.matmul %4, %6, %cst {dimension_numbers = #tpu.dot_dimension_numbers<[1], [0], [0], [1], [0, 0, 1, 1], [], []>} : vector<8x896xbf16>, vector<896x128xbf16>, vector<8x128xf32> -> vector<8x128xf32>
    %c0_5 = arith.constant 0 : index
    %c0_6 = arith.constant 0 : index
    %c0_7 = arith.constant 0 : index
    %8 = vector.load %arg4[%c0_5, %c0_6, %c0_7] : memref<1x1x128xf32, #tpu.memory_space<vmem>>, vector<1x1x128xf32>
    %9 = vector.shape_cast %8 : vector<1x1x128xf32> to vector<1x128xf32>
    %10 = vector.broadcast %9 : vector<1x128xf32> to vector<8x128xf32>
    %11 = arith.addf %7, %10 : vector<8x128xf32>
    %cst_8 = arith.constant 0.000000e+00 : f32
    %12 = vector.broadcast %cst_8 : f32 to vector<8x128xf32>
    %13 = arith.maximumf %11, %12 : vector<8x128xf32>
    %14 = arith.truncf %13 : vector<8x128xf32> to vector<8x128xbf16>
    %c0_9 = arith.constant 0 : index
    %c0_10 = arith.constant 0 : index
    %c0_11 = arith.constant 0 : index
    %15 = vector.load %arg5[%c0_9, %c0_10, %c0_11] : memref<1x128x256xbf16, #tpu.memory_space<vmem>>, vector<1x128x256xbf16>
    %16 = vector.shape_cast %15 : vector<1x128x256xbf16> to vector<128x256xbf16>
    %cst_12 = arith.constant dense<0.000000e+00> : vector<8x256xf32>
    %17 = tpu.matmul %14, %16, %cst_12 {dimension_numbers = #tpu.dot_dimension_numbers<[1], [0], [0], [1], [0, 0, 1, 1], [], []>} : vector<8x128xbf16>, vector<128x256xbf16>, vector<8x256xf32> -> vector<8x256xf32>
    %c0_13 = arith.constant 0 : index
    %c0_14 = arith.constant 0 : index
    %c0_15 = arith.constant 0 : index
    %18 = vector.load %arg6[%c0_13, %c0_14, %c0_15] : memref<1x1x256xf32, #tpu.memory_space<vmem>>, vector<1x1x256xf32>
    %19 = vector.shape_cast %18 : vector<1x1x256xf32> to vector<1x256xf32>
    %20 = vector.broadcast %19 : vector<1x256xf32> to vector<8x256xf32>
    %21 = arith.addf %17, %20 : vector<8x256xf32>
    %cst_16 = arith.constant 0.000000e+00 : f32
    %22 = vector.broadcast %cst_16 : f32 to vector<8x256xf32>
    %23 = arith.maximumf %21, %22 : vector<8x256xf32>
    %24 = arith.truncf %23 : vector<8x256xf32> to vector<8x256xbf16>
    %c0_17 = arith.constant 0 : index
    %c0_18 = arith.constant 0 : index
    %c0_19 = arith.constant 0 : index
    %25 = vector.load %arg7[%c0_17, %c0_18, %c0_19] : memref<1x256x896xbf16, #tpu.memory_space<vmem>>, vector<1x256x896xbf16>
    %26 = vector.shape_cast %25 : vector<1x256x896xbf16> to vector<256x896xbf16>
    %cst_20 = arith.constant dense<0.000000e+00> : vector<8x896xf32>
    %27 = tpu.matmul %24, %26, %cst_20 {dimension_numbers = #tpu.dot_dimension_numbers<[1], [0], [0], [1], [0, 0, 1, 1], [], []>} : vector<8x256xbf16>, vector<256x896xbf16>, vector<8x896xf32> -> vector<8x896xf32>
    %c0_21 = arith.constant 0 : index
    %c0_22 = arith.constant 0 : index
    %c0_23 = arith.constant 0 : index
    %28 = vector.load %arg8[%c0_21, %c0_22, %c0_23] : memref<1x1x896xf32, #tpu.memory_space<vmem>>, vector<1x1x896xf32>
    %29 = vector.shape_cast %28 : vector<1x1x896xf32> to vector<1x896xf32>
    %30 = vector.broadcast %29 : vector<1x896xf32> to vector<8x896xf32>
    %31 = arith.addf %27, %30 : vector<8x896xf32>
    %c0_24 = arith.constant 0 : index
    %c0_25 = arith.constant 0 : index
    %32 = vector.load %arg10[%c0_24, %c0_25] : memref<8x896xf32, #tpu.memory_space<vmem>>, vector<8x896xf32>
    tpu.vector_store %arg10[%c0_24, %c0_25], %31 {strides = array<i32>} : memref<8x896xf32, #tpu.memory_space<vmem>>, vector<8x896xf32>,
    %c1_i32 = arith.constant 1 : i32
    %33 = arith.cmpi eq, %arg1, %c1_i32 : i32
    %34 = arith.extui %33 : i1 to i32
    %c0_i32_26 = arith.constant 0 : i32
    %35 = arith.cmpi ne, %34, %c0_i32_26 : i32
    scf.if %35 {
      %c0_27 = arith.constant 0 : index
      %c0_28 = arith.constant 0 : index
      %36 = vector.load %arg9[%c0_27, %c0_28] : memref<8x896xf32, #tpu.memory_space<vmem>>, vector<8x896xf32>
      tpu.vector_store %arg9[%c0_27, %c0_28], %31 {strides = array<i32>} : memref<8x896xf32, #tpu.memory_space<vmem>>, vector<8x896xf32>,
    } else {
    }
    return
  }
  func.func @transform_0(%arg0: i32, %arg1: i32) -> (i32, i32) {
    %c0_i32 = arith.constant 0 : i32
    %c0_i32_0 = arith.constant 0 : i32
    return %arg0, %c0_i32 : i32, i32
  }
  func.func @transform_1(%arg0: i32, %arg1: i32) -> (i32, i32, i32) {
    %c0_i32 = arith.constant 0 : i32
    %c0_i32_0 = arith.constant 0 : i32
    %c0_i32_1 = arith.constant 0 : i32
    return %arg1, %c0_i32, %c0_i32_0 : i32, i32, i32
  }
  func.func @transform_2(%arg0: i32, %arg1: i32) -> (i32, i32, i32) {
    %c0_i32 = arith.constant 0 : i32
    %c0_i32_0 = arith.constant 0 : i32
    %c0_i32_1 = arith.constant 0 : i32
    return %arg1, %c0_i32, %c0_i32_0 : i32, i32, i32
  }
  func.func @transform_3(%arg0: i32, %arg1: i32) -> (i32, i32, i32) {
    %c0_i32 = arith.constant 0 : i32
    %c0_i32_0 = arith.constant 0 : i32
    %c0_i32_1 = arith.constant 0 : i32
    return %arg1, %c0_i32, %c0_i32_0 : i32, i32, i32
  }
  func.func @transform_4(%arg0: i32, %arg1: i32) -> (i32, i32, i32) {
    %c0_i32 = arith.constant 0 : i32
    %c0_i32_0 = arith.constant 0 : i32
    %c0_i32_1 = arith.constant 0 : i32
    return %arg1, %c0_i32, %c0_i32_0 : i32, i32, i32
  }
  func.func @transform_5(%arg0: i32, %arg1: i32) -> (i32, i32, i32) {
    %c0_i32 = arith.constant 0 : i32
    %c0_i32_0 = arith.constant 0 : i32
    %c0_i32_1 = arith.constant 0 : i32
    return %arg1, %c0_i32, %c0_i32_0 : i32, i32, i32
  }
  func.func @transform_6(%arg0: i32, %arg1: i32) -> (i32, i32, i32) {
    %c0_i32 = arith.constant 0 : i32
    %c0_i32_0 = arith.constant 0 : i32
    %c0_i32_1 = arith.constant 0 : i32
    return %arg1, %c0_i32, %c0_i32_0 : i32, i32, i32
  }
  func.func @transform_7(%arg0: i32, %arg1: i32) -> (i32, i32) {
    %c0_i32 = arith.constant 0 : i32
    %c0_i32_0 = arith.constant 0 : i32
    return %arg0, %c0_i32 : i32, i32
  }
}

</mosaic_0001>

<llo_original>
// kernel: sequential_layers_forward.1
$region0: #{sequential_layers_forward.1}
  #allocation0 [shape = 'u32[]', space=smem, size = 0x4, offset = 0x4, fixed_abs, tag = 'smem constant byte address 0x4 - core index']
  #allocation1 [shape = 'u32[144,128]{1,0:T(1,128)}', space=vmem, size = 0x12000, scoped, tag = 'internal scratch']
  #allocation2 [shape = 'f32[8,896]{1,0:T(8,128)}', space=vmem, size = 0x7000, scoped, tag = 'scratch operand']
  %s0 = inlined_call_operand.vmem [shape: f32[16,896], index: 0, kind: input, shape index: {}]
  %s1 = inlined_call_operand.hbm [shape: bf16[2,896,128], index: 1, kind: input, shape index: {}]
  %s2 = inlined_call_operand.vmem [shape: f32[2,1,128], index: 2, kind: input, shape index: {}]
  %s3 = inlined_call_operand.vmem [shape: bf16[2,128,256], index: 3, kind: input, shape index: {}]
  %s4 = inlined_call_operand.vmem [shape: f32[2,1,256], index: 4, kind: input, shape index: {}]
  %s5 = inlined_call_operand.hbm [shape: bf16[2,256,896], index: 5, kind: input, shape index: {}]
  %s6 = inlined_call_operand.vmem [shape: f32[2,1,896], index: 6, kind: input, shape index: {}]
  %s7 = inlined_call_operand.vmem [shape: f32[16,896], index: 7, kind: output, shape index: {}]
  %s8 = sld [smem:[#allocation0]]
  $region77: #{sequential_layers_forward.1} parent=0
    _
  %s10 = ssub.s32 1, %s8
  %s11 = scalar_select 0, %s10, %s8
  $region1: #{sequential_layers_forward.1} parent=0
    #allocation3 [shape = 'u8[458752]{0}', space=vmem, size = 0x70000, scoped, tag = 'input window, operand 1']
    #allocation4 [shape = 's32[2]{0}', space=sflag, size = 0x8, scoped, tag = 'scoped memory for sequential_layers_forward.1']
    #allocation5 [shape = 'u8[917504]{0}', space=vmem, size = 0xe0000, scoped, tag = 'input window, operand 5']
    #allocation6 [shape = 's32[2]{0}', space=sflag, size = 0x8, scoped, tag = 'scoped memory for sequential_layers_forward.1']
    %12 = vsyncpa [#allocation4], 0
    %s13 = scalar_lea.sflag [#allocation4], 1
    %14 = vsyncpa %s13, 0
    %15 = vsyncpa [#allocation6], 0
    %s16 = scalar_lea.sflag [#allocation6], 1
    %17 = vsyncpa %s16, 0
    loop: start=0, step=1, limit=6
    $region2: #{sequential_layers_forward.1} parent=1 // loop_pre_header
      _
    $region3: #{sequential_layers_forward.1} parent=1 // loop_header
      %s19 = sphi 0, %s23
      %p20 = scmp.ge.s32.totalorder %s19, 6
      %s26 = sphi 0, %s38
      %s27 = sphi 0, %s34
      %s28 = sphi 0, %s26
      %s29 = sphi 0, %s27
      %s30 = sphi 0, %s28
      %s31 = sphi 0, %s29
      %s41 = sphi 0, %s43
      %s44 = sphi 0, %s41
      %s45 = sphi 0, %s44
      %s61 = sphi 0, %s45
      %s67 = sphi 0, %s69
      %s70 = sphi 0, %s67
      %s71 = sphi 0, %s70
      %s87 = sphi 0, %s71
      %s93 = sphi 0, %s95
      %s96 = sphi 0, %s93
      %s97 = sphi 0, %s96
      %s113 = sphi 0, %s97
      %s119 = sphi 0, %s121
      %s122 = sphi 0, %s119
      %s123 = sphi 0, %s122
      %s139 = sphi 0, %s123
      %s145 = sphi 0, %s147
      %s148 = sphi 0, %s145
      %s149 = sphi 0, %s148
      %s165 = sphi 0, %s149
      %s171 = sphi 0, %s173
      %s174 = sphi 0, %s171
      %s175 = sphi 0, %s174
      %s191 = sphi 0, %s175
      %s197 = sphi 0, %s199
      %s200 = sphi 0, %s197
      %s201 = sphi 0, %s200
      %s217 = sphi 0, %s201
      %s223 = sphi 0, %s225
      %s226 = sphi 0, %s223
      %s227 = sphi 0, %s226
      %s243 = sphi 0, %s227
    $region4: #{sequential_layers_forward.1} parent=1 // loop_header_branch
      %22 = sbr.rel (%p20) target = $region8
    $region5: #{sequential_layers_forward.1} parent=1 // loop_body
      %s24 = ssub.s32 %s19, 1
      %s25 = ssub.s32 %s19, 2
      %s32 = sadd.s32 1, %s27
      %p33 = scmp.ge.s32.totalorder %s32, 2
      %s34 = scalar_select %p33, 0, %s32
      %s35 = sadd.s32 1, %s26
      %s36 = scalar_select %p33, %s35, %s26
      %p37 = scmp.ge.s32.totalorder %s36, 2
      %s38 = scalar_select %p37, 0, %s36
      %s39 = ssub.s32 %s26, %s38
      %p40 = scmp.eq.s32.totalorder %s39, 0
      %s42 = sadd.s32 %s41, 1
      %s43 = scalar_select %p40, %s41, %s42
      %p46 = pneg %p40
      %p47 = scmp.eq.s32.totalorder %s19, 3
      %p48 = por %p46, %p47
      %p49 = scmp.ne.s32.totalorder %s41, %s44
      %p50 = scmp.eq.s32.totalorder %s19, 0
      %p51 = por %p49, %p50
      %p52 = scmp.ne.s32.totalorder %s41, %s44
      %p53 = scmp.eq.s32.totalorder %s24, 3
      %p54 = por %p52, %p53
      %p55 = scmp.ne.s32.totalorder %s44, %s45
      %p56 = scmp.eq.s32.totalorder %s24, 0
      %p57 = por %p55, %p56
      %p58 = scmp.ne.s32.totalorder %s44, %s45
      %p59 = scmp.eq.s32.totalorder %s25, 3
      %p60 = por %p58, %p59
      %p62 = scmp.ne.s32.totalorder %s45, %s61
      %p63 = scmp.eq.s32.totalorder %s25, 0
      %p64 = por %p62, %p63
      %s65 = ssub.s32 %s27, %s34
      %p66 = scmp.eq.s32.totalorder %s65, 0
      %s68 = sadd.s32 %s67, 1
      %s69 = scalar_select %p66, %s67, %s68
      %p72 = pneg %p66
      %p73 = scmp.eq.s32.totalorder %s19, 3
      %p74 = por %p72, %p73
      %p75 = scmp.ne.s32.totalorder %s67, %s70
      %p76 = scmp.eq.s32.totalorder %s19, 0
      %p77 = por %p75, %p76
      %p78 = scmp.ne.s32.totalorder %s67, %s70
      %p79 = scmp.eq.s32.totalorder %s24, 3
      %p80 = por %p78, %p79
      %p81 = scmp.ne.s32.totalorder %s70, %s71
      %p82 = scmp.eq.s32.totalorder %s24, 0
      %p83 = por %p81, %p82
      %p84 = scmp.ne.s32.totalorder %s70, %s71
      %p85 = scmp.eq.s32.totalorder %s25, 3
      %p86 = por %p84, %p85
      %p88 = scmp.ne.s32.totalorder %s71, %s87
      %p89 = scmp.eq.s32.totalorder %s25, 0
      %p90 = por %p88, %p89
      %s91 = ssub.s32 %s27, %s34
      %p92 = scmp.eq.s32.totalorder %s91, 0
      %s94 = sadd.s32 %s93, 1
      %s95 = scalar_select %p92, %s93, %s94
      %p98 = pneg %p92
      %p99 = scmp.eq.s32.totalorder %s19, 3
      %p100 = por %p98, %p99
      %p101 = scmp.ne.s32.totalorder %s93, %s96
      %p102 = scmp.eq.s32.totalorder %s19, 0
      %p103 = por %p101, %p102
      %p104 = scmp.ne.s32.totalorder %s93, %s96
      %p105 = scmp.eq.s32.totalorder %s24, 3
      %p106 = por %p104, %p105
      %p107 = scmp.ne.s32.totalorder %s96, %s97
      %p108 = scmp.eq.s32.totalorder %s24, 0
      %p109 = por %p107, %p108
      %p110 = scmp.ne.s32.totalorder %s96, %s97
      %p111 = scmp.eq.s32.totalorder %s25, 3
      %p112 = por %p110, %p111
      %p114 = scmp.ne.s32.totalorder %s97, %s113
      %p115 = scmp.eq.s32.totalorder %s25, 0
      %p116 = por %p114, %p115
      %s117 = ssub.s32 %s27, %s34
      %p118 = scmp.eq.s32.totalorder %s117, 0
      %s120 = sadd.s32 %s119, 1
      %s121 = scalar_select %p118, %s119, %s120
      %p124 = pneg %p118
      %p125 = scmp.eq.s32.totalorder %s19, 3
      %p126 = por %p124, %p125
      %p127 = scmp.ne.s32.totalorder %s119, %s122
      %p128 = scmp.eq.s32.totalorder %s19, 0
      %p129 = por %p127, %p128
      %p130 = scmp.ne.s32.totalorder %s119, %s122
      %p131 = scmp.eq.s32.totalorder %s24, 3
      %p132 = por %p130, %p131
      %p133 = scmp.ne.s32.totalorder %s122, %s123
      %p134 = scmp.eq.s32.totalorder %s24, 0
      %p135 = por %p133, %p134
      %p136 = scmp.ne.s32.totalorder %s122, %s123
      %p137 = scmp.eq.s32.totalorder %s25, 3
      %p138 = por %p136, %p137
      %p140 = scmp.ne.s32.totalorder %s123, %s139
      %p141 = scmp.eq.s32.totalorder %s25, 0
      %p142 = por %p140, %p141
      %s143 = ssub.s32 %s27, %s34
      %p144 = scmp.eq.s32.totalorder %s143, 0
      %s146 = sadd.s32 %s145, 1
      %s147 = scalar_select %p144, %s145, %s146
      %p150 = pneg %p144
      %p151 = scmp.eq.s32.totalorder %s19, 3
      %p152 = por %p150, %p151
      %p153 = scmp.ne.s32.totalorder %s145, %s148
      %p154 = scmp.eq.s32.totalorder %s19, 0
      %p155 = por %p153, %p154
      %p156 = scmp.ne.s32.totalorder %s145, %s148
      %p157 = scmp.eq.s32.totalorder %s24, 3
      %p158 = por %p156, %p157
      %p159 = scmp.ne.s32.totalorder %s148, %s149
      %p160 = scmp.eq.s32.totalorder %s24, 0
      %p161 = por %p159, %p160
      %p162 = scmp.ne.s32.totalorder %s148, %s149
      %p163 = scmp.eq.s32.totalorder %s25, 3
      %p164 = por %p162, %p163
      %p166 = scmp.ne.s32.totalorder %s149, %s165
      %p167 = scmp.eq.s32.totalorder %s25, 0
      %p168 = por %p166, %p167
      %s169 = ssub.s32 %s27, %s34
      %p170 = scmp.eq.s32.totalorder %s169, 0
      %s172 = sadd.s32 %s171, 1
      %s173 = scalar_select %p170, %s171, %s172
      %p176 = pneg %p170
      %p177 = scmp.eq.s32.totalorder %s19, 3
      %p178 = por %p176, %p177
      %p179 = scmp.ne.s32.totalorder %s171, %s174
      %p180 = scmp.eq.s32.totalorder %s19, 0
      %p181 = por %p179, %p180
      %p182 = scmp.ne.s32.totalorder %s171, %s174
      %p183 = scmp.eq.s32.totalorder %s24, 3
      %p184 = por %p182, %p183
      %p185 = scmp.ne.s32.totalorder %s174, %s175
      %p186 = scmp.eq.s32.totalorder %s24, 0
      %p187 = por %p185, %p186
      %p188 = scmp.ne.s32.totalorder %s174, %s175
      %p189 = scmp.eq.s32.totalorder %s25, 3
      %p190 = por %p188, %p189
      %p192 = scmp.ne.s32.totalorder %s175, %s191
      %p193 = scmp.eq.s32.totalorder %s25, 0
      %p194 = por %p192, %p193
      %s195 = ssub.s32 %s27, %s34
      %p196 = scmp.eq.s32.totalorder %s195, 0
      %s198 = sadd.s32 %s197, 1
      %s199 = scalar_select %p196, %s197, %s198
      %p202 = pneg %p196
      %p203 = scmp.eq.s32.totalorder %s19, 3
      %p204 = por %p202, %p203
      %p205 = scmp.ne.s32.totalorder %s197, %s200
      %p206 = scmp.eq.s32.totalorder %s19, 0
      %p207 = por %p205, %p206
      %p208 = scmp.ne.s32.totalorder %s197, %s200
      %p209 = scmp.eq.s32.totalorder %s24, 3
      %p210 = por %p208, %p209
      %p211 = scmp.ne.s32.totalorder %s200, %s201
      %p212 = scmp.eq.s32.totalorder %s24, 0
      %p213 = por %p211, %p212
      %p214 = scmp.ne.s32.totalorder %s200, %s201
      %p215 = scmp.eq.s32.totalorder %s25, 3
      %p216 = por %p214, %p215
      %p218 = scmp.ne.s32.totalorder %s201, %s217
      %p219 = scmp.eq.s32.totalorder %s25, 0
      %p220 = por %p218, %p219
      %s221 = ssub.s32 %s26, %s38
      %p222 = scmp.eq.s32.totalorder %s221, 0
      %s224 = sadd.s32 %s223, 1
      %s225 = scalar_select %p222, %s223, %s224
      %p228 = pneg %p222
      %p229 = scmp.eq.s32.totalorder %s19, 3
      %p230 = por %p228, %p229
      %p231 = scmp.ne.s32.totalorder %s223, %s226
      %p232 = scmp.eq.s32.totalorder %s19, 0
      %p233 = por %p231, %p232
      %p234 = scmp.ne.s32.totalorder %s223, %s226
      %p235 = scmp.eq.s32.totalorder %s24, 3
      %p236 = por %p234, %p235
      %p237 = scmp.ne.s32.totalorder %s226, %s227
      %p238 = scmp.eq.s32.totalorder %s24, 0
      %p239 = por %p237, %p238
      %p240 = scmp.ne.s32.totalorder %s226, %s227
      %p241 = scmp.eq.s32.totalorder %s25, 3
      %p242 = por %p240, %p241
      %p244 = scmp.ne.s32.totalorder %s227, %s243
      %p245 = scmp.eq.s32.totalorder %s25, 0
      %p246 = por %p244, %p245
      %p247 = scmp.le.s32.totalorder 1, %s19
      %p248 = scmp.lt.s32.totalorder %s19, 5
      %p249 = pnand %p247, %p248
      %p250 = pneg %p249
      // Predicated region
      $region9: #{sequential_layers_forward.1} parent=5 // pred_check
        _
      $region10: #{sequential_layers_forward.1} parent=5 // pred_check_branch
        %252 = sbr.rel (%p249) target = $region12
      $region11: #{sequential_layers_forward.1} parent=5 // pred_region
        %s253 = ssub.s32 %s19, 1
      $region12: #{sequential_layers_forward.1} parent=5 // pred_fallthru
        _
      %p254 = scmp.lt.s32.totalorder %s19, 4
      // Predicated region
      $region13: #{sequential_layers_forward.1} parent=5 // pred_check
        %p255 = pneg %p254
      $region14: #{sequential_layers_forward.1} parent=5 // pred_check_branch
        %257 = sbr.rel (%p255) target = $region16
      $region15: #{sequential_layers_forward.1} parent=5 // pred_region
        // Predicated region
        $region17: #{sequential_layers_forward.1} parent=15 // pred_check
          %p258 = pneg %p51
        $region18: #{sequential_layers_forward.1} parent=15 // pred_check_branch
          %260 = sbr.rel (%p258) target = $region20
        $region19: #{sequential_layers_forward.1} parent=15 // pred_region
          %p261 = scmp.lt.s32.totalorder %s26, 1
          %s262 = scalar_select %p261, %s26, 1
          %s263 = smul.addr %s262, 7
          %s264 = smul.addr %s263, 8
          %s265 = scalar_lea.vmem %s0, %s264
        $region20: #{sequential_layers_forward.1} parent=15 // pred_fallthru
          _
        // Predicated region
        $region21: #{sequential_layers_forward.1} parent=15 // pred_check
          %p266 = pneg %p77
        $region22: #{sequential_layers_forward.1} parent=15 // pred_check_branch
          %268 = sbr.rel (%p266) target = $region24
        $region23: #{sequential_layers_forward.1} parent=15 // pred_region
          %s269 = sand.u32 %s67, 1
          %s270 = scalar_lea.sflag [#allocation4], %s269
          %s271 = sand.u32 %s67, 1
          %s272 = smul.addr %s271, 448
          %s273 = scalar_lea.vmem [#allocation3], %s272
          %s275 = ssub.s32 7168, 7168
          %276 = vsyncadd %s270, %s275
          %s277 = smul.addr %s27, 112
          %s278 = smul.addr %s277, 64
          %s279 = scalar_lea.hbm %s1, %s278
          %s280 = sshll.u32 %s273, 4
          %s281 = int_to_ptr.vmem [resolvable:$true] %s280
          %286 = dma.hbm_to_vmem [thread:$0]  %s279, 7168, %s281, %s270, 64, 64, 4
        $region24: #{sequential_layers_forward.1} parent=15 // pred_fallthru
          _
        // Predicated region
        $region25: #{sequential_layers_forward.1} parent=15 // pred_check
          %p287 = pneg %p103
        $region26: #{sequential_layers_forward.1} parent=15 // pred_check_branch
          %289 = sbr.rel (%p287) target = $region28
        $region27: #{sequential_layers_forward.1} parent=15 // pred_region
          %p290 = scmp.lt.s32.totalorder %s27, 1
          %s291 = scalar_select %p290, %s27, 1
          %s292 = scalar_lea.vmem %s2, %s291
        $region28: #{sequential_layers_forward.1} parent=15 // pred_fallthru
          _
        // Predicated region
        $region29: #{sequential_layers_forward.1} parent=15 // pred_check
          %p293 = pneg %p129
        $region30: #{sequential_layers_forward.1} parent=15 // pred_check_branch
          %295 = sbr.rel (%p293) target = $region32
        $region31: #{sequential_layers_forward.1} parent=15 // pred_region
          %p296 = scmp.lt.s32.totalorder %s27, 1
          %s297 = scalar_select %p296, %s27, 1
          %s298 = smul.addr %s297, 32
          %s299 = smul.addr %s298, 4
          %s300 = scalar_lea.vmem %s3, %s299
        $region32: #{sequential_layers_forward.1} parent=15 // pred_fallthru
          _
        // Predicated region
        $region33: #{sequential_layers_forward.1} parent=15 // pred_check
          %p301 = pneg %p155
        $region34: #{sequential_layers_forward.1} parent=15 // pred_check_branch
          %303 = sbr.rel (%p301) target = $region36
        $region35: #{sequential_layers_forward.1} parent=15 // pred_region
          %p304 = scmp.lt.s32.totalorder %s27, 1
          %s305 = scalar_select %p304, %s27, 1
          %s306 = smul.addr %s305, 2
          %s307 = scalar_lea.vmem %s4, %s306
        $region36: #{sequential_layers_forward.1} parent=15 // pred_fallthru
          _
        // Predicated region
        $region37: #{sequential_layers_forward.1} parent=15 // pred_check
          %p308 = pneg %p181
        $region38: #{sequential_layers_forward.1} parent=15 // pred_check_branch
          %310 = sbr.rel (%p308) target = $region40
        $region39: #{sequential_layers_forward.1} parent=15 // pred_region
          %s311 = sand.u32 %s171, 1
          %s312 = scalar_lea.sflag [#allocation6], %s311
          %s313 = sand.u32 %s171, 1
          %s314 = smul.addr %s313, 896
          %s315 = scalar_lea.vmem [#allocation5], %s314
          %s317 = ssub.s32 14336, 14336
          %318 = vsyncadd %s312, %s317
          %s319 = smul.addr %s27, 224
          %s320 = smul.addr %s319, 64
          %s321 = scalar_lea.hbm %s5, %s320
          %s322 = sshll.u32 %s315, 4
          %s323 = int_to_ptr.vmem [resolvable:$true] %s322
          %328 = dma.hbm_to_vmem [thread:$0]  %s321, 14336, %s323, %s312, 448, 448, 28
        $region40: #{sequential_layers_forward.1} parent=15 // pred_fallthru
          _
        // Predicated region
        $region41: #{sequential_layers_forward.1} parent=15 // pred_check
          %p329 = pneg %p207
        $region42: #{sequential_layers_forward.1} parent=15 // pred_check_branch
          %331 = sbr.rel (%p329) target = $region44
        $region43: #{sequential_layers_forward.1} parent=15 // pred_region
          %p332 = scmp.lt.s32.totalorder %s27, 1
          %s333 = scalar_select %p332, %s27, 1
          %s334 = smul.addr %s333, 7
          %s335 = scalar_lea.vmem %s6, %s334
        $region44: #{sequential_layers_forward.1} parent=15 // pred_fallthru
          _
      $region16: #{sequential_layers_forward.1} parent=5 // pred_fallthru
        _
      %p336 = scmp.le.s32.totalorder 1, %s19
      %p337 = scmp.lt.s32.totalorder %s19, 5
      %p338 = pnand %p336, %p337
      %p339 = pneg %p338
      // Predicated region
      $region45: #{sequential_layers_forward.1} parent=5 // pred_check
        _
      $region46: #{sequential_layers_forward.1} parent=5 // pred_check_branch
        %341 = sbr.rel (%p338) target = $region48
      $region47: #{sequential_layers_forward.1} parent=5 // pred_region
        %s342 = ssub.s32 %s19, 1
        %s343 = sand.u32 %s70, 1
        %s344 = scalar_lea.sflag [#allocation4], %s343
        %s345 = sand.u32 %s70, 1
        %s346 = smul.addr %s345, 448
        %s347 = scalar_lea.vmem [#allocation3], %s346
        // Predicated region
        $region49: #{sequential_layers_forward.1} parent=47 // pred_check
          %p348 = pneg %p83
        $region50: #{sequential_layers_forward.1} parent=47 // pred_check_branch
          %350 = sbr.rel (%p348) target = $region52
        $region51: #{sequential_layers_forward.1} parent=47 // pred_region
          %351 = dma.done %s344, 7168
        $region52: #{sequential_layers_forward.1} parent=47 // pred_fallthru
          _
        %s352 = sand.u32 %s174, 1
        %s353 = scalar_lea.sflag [#allocation6], %s352
        %s354 = sand.u32 %s174, 1
        %s355 = smul.addr %s354, 896
        %s356 = scalar_lea.vmem [#allocation5], %s355
        // Predicated region
        $region53: #{sequential_layers_forward.1} parent=47 // pred_check
          %p357 = pneg %p187
        $region54: #{sequential_layers_forward.1} parent=47 // pred_check_branch
          %359 = sbr.rel (%p357) target = $region56
        $region55: #{sequential_layers_forward.1} parent=47 // pred_region
          %360 = dma.done %s353, 14336
        $region56: #{sequential_layers_forward.1} parent=47 // pred_fallthru
          _
        %p361 = scmp.lt.s32.totalorder %s28, 1
        %s362 = scalar_select %p361, %s28, 1
        %s363 = smul.addr %s362, 7
        %s364 = smul.addr %s363, 8
        %s365 = scalar_lea.vmem %s0, %s364
        %p366 = pneg %p57
        %p367 = pneg %p54
        %s368 = sand.u32 %s70, 1
        %s369 = scalar_lea.sflag [#allocation4], %s368
        %s370 = sand.u32 %s70, 1
        %s371 = smul.addr %s370, 448
        %s372 = scalar_lea.vmem [#allocation3], %s371
        %p373 = pneg %p83
        %p374 = pneg %p80
        %p375 = scmp.lt.s32.totalorder %s29, 1
        %s376 = scalar_select %p375, %s29, 1
        %s377 = scalar_lea.vmem %s2, %s376
        %p378 = pneg %p109
        %p379 = pneg %p106
        %p380 = scmp.lt.s32.totalorder %s29, 1
        %s381 = scalar_select %p380, %s29, 1
        %s382 = smul.addr %s381, 32
        %s383 = smul.addr %s382, 4
        %s384 = scalar_lea.vmem %s3, %s383
        %p385 = pneg %p135
        %p386 = pneg %p132
        %p387 = scmp.lt.s32.totalorder %s29, 1
        %s388 = scalar_select %p387, %s29, 1
        %s389 = smul.addr %s388, 2
        %s390 = scalar_lea.vmem %s4, %s389
        %p391 = pneg %p161
        %p392 = pneg %p158
        %s393 = sand.u32 %s174, 1
        %s394 = scalar_lea.sflag [#allocation6], %s393
        %s395 = sand.u32 %s174, 1
        %s396 = smul.addr %s395, 896
        %s397 = scalar_lea.vmem [#allocation5], %s396
        %p398 = pneg %p187
        %p399 = pneg %p184
        %p400 = scmp.lt.s32.totalorder %s29, 1
        %s401 = scalar_select %p400, %s29, 1
        %s402 = smul.addr %s401, 7
        %s403 = scalar_lea.vmem %s6, %s402
        %p404 = pneg %p213
        %p405 = pneg %p210
        %p406 = pneg %p239
        %p407 = pneg %p236
        %p408 = scmp.lt.s32.totalorder %s28, 1
        %s409 = scalar_select %p408, %s28, 1
        %s410 = smul.addr %s409, 7
        %s411 = smul.addr %s410, 8
        %s412 = scalar_lea.vmem %s7, %s411
        %p413 = scmp.lt.s32.totalorder %s28, 1
        %s414 = scalar_select %p413, %s28, 1
        %s415 = smul.addr %s414, 7
        %s416 = smul.addr %s415, 8
        %s417 = scalar_lea.vmem %s0, %s416
        %p418 = scmp.lt.s32.totalorder %s29, 1
        %s419 = scalar_select %p418, %s29, 1
        %s420 = scalar_lea.vmem %s2, %s419
        %p421 = scmp.lt.s32.totalorder %s29, 1
        %s422 = scalar_select %p421, %s29, 1
        %s423 = smul.addr %s422, 32
        %s424 = smul.addr %s423, 4
        %s425 = scalar_lea.vmem %s3, %s424
        %p426 = scmp.lt.s32.totalorder %s29, 1
        %s427 = scalar_select %p426, %s29, 1
        %s428 = smul.addr %s427, 2
        %s429 = scalar_lea.vmem %s4, %s428
        %p430 = scmp.lt.s32.totalorder %s29, 1
        %s431 = scalar_select %p430, %s29, 1
        %s432 = smul.addr %s431, 7
        %s433 = scalar_lea.vmem %s6, %s432
        %p434 = scmp.lt.s32.totalorder %s28, 1
        %s435 = scalar_select %p434, %s28, 1
        %s436 = smul.addr %s435, 7
        %s437 = smul.addr %s436, 8
        %s438 = scalar_lea.vmem %s7, %s437
        %p440 = scmp.eq.s32.totalorder %s29, 0
        // Predicated region
        $region57: #{sequential_layers_forward.1} parent=47 // pred_check
          %p441 = pneg %p440
        $region58: #{sequential_layers_forward.1} parent=47 // pred_check_branch
          %443 = sbr.rel (%p441) target = $region60
        $region59: #{sequential_layers_forward.1} parent=47 // pred_region
          %v444 = vld [vmem:[%s417] sm:$0xff]
          %v445 = vld [vmem:[%s417 + $0x8] sm:$0xff]
          %v446 = vld [vmem:[%s417 + $0x10] sm:$0xff]
          %v447 = vld [vmem:[%s417 + $0x18] sm:$0xff]
          %v448 = vld [vmem:[%s417 + $0x20] sm:$0xff]
          %v449 = vld [vmem:[%s417 + $0x28] sm:$0xff]
          %v450 = vld [vmem:[%s417 + $0x30] sm:$0xff]
          %451 = vst [vmem:[#allocation2] sm:$0xff] %v444
          %452 = vst [vmem:[#allocation2 + $0x8] sm:$0xff] %v445
          %453 = vst [vmem:[#allocation2 + $0x10] sm:$0xff] %v446
          %454 = vst [vmem:[#allocation2 + $0x18] sm:$0xff] %v447
          %455 = vst [vmem:[#allocation2 + $0x20] sm:$0xff] %v448
          %456 = vst [vmem:[#allocation2 + $0x28] sm:$0xff] %v449
          %457 = vst [vmem:[#allocation2 + $0x30] sm:$0xff] %v450
        $region60: #{sequential_layers_forward.1} parent=47 // pred_fallthru
          _
        %v458 = vld [vmem:[#allocation2] sm:$0xff]
        %v459 = vld [vmem:[#allocation2 + $0x8] sm:$0xff]
        %v460 = vld [vmem:[#allocation2 + $0x10] sm:$0xff]
        %v461 = vld [vmem:[#allocation2 + $0x18] sm:$0xff]
        %v462 = vld [vmem:[#allocation2 + $0x20] sm:$0xff]
        %v463 = vld [vmem:[#allocation2 + $0x28] sm:$0xff]
        %v464 = vld [vmem:[#allocation2 + $0x30] sm:$0xff]
        %v465 = vpack.c.bf16 %v458, %v458
        %v466 = vpack.c.bf16 %v459, %v459
        %v467 = vpack.c.bf16 %v460, %v460
        %v468 = vpack.c.bf16 %v461, %v461
        %v469 = vpack.c.bf16 %v462, %v462
        %v470 = vpack.c.bf16 %v463, %v463
        %v471 = vpack.c.bf16 %v464, %v464
        %v472 = vld [vmem:[%s347] sm:$0xf]
        %v473 = vld [vmem:[%s347 + $0x4] sm:$0xf]
        %v474 = vld [vmem:[%s347 + $0x8] sm:$0xf]
        %v475 = vld [vmem:[%s347 + $0xc] sm:$0xf]
        %v476 = vld [vmem:[%s347 + $0x10] sm:$0xf]
        %v477 = vld [vmem:[%s347 + $0x14] sm:$0xf]
        %v478 = vld [vmem:[%s347 + $0x18] sm:$0xf]
        %v479 = vld [vmem:[%s347 + $0x1c] sm:$0xf]
        %v480 = vld [vmem:[%s347 + $0x20] sm:$0xf]
        %v481 = vld [vmem:[%s347 + $0x24] sm:$0xf]
        %v482 = vld [vmem:[%s347 + $0x28] sm:$0xf]
        %v483 = vld [vmem:[%s347 + $0x2c] sm:$0xf]
        %v484 = vld [vmem:[%s347 + $0x30] sm:$0xf]
        %v485 = vld [vmem:[%s347 + $0x34] sm:$0xf]
        %v486 = vld [vmem:[%s347 + $0x38] sm:$0xf]
        %v487 = vld [vmem:[%s347 + $0x3c] sm:$0xf]
        %v488 = vld [vmem:[%s347 + $0x40] sm:$0xf]
        %v489 = vld [vmem:[%s347 + $0x44] sm:$0xf]
        %v490 = vld [vmem:[%s347 + $0x48] sm:$0xf]
        %v491 = vld [vmem:[%s347 + $0x4c] sm:$0xf]
        %v492 = vld [vmem:[%s347 + $0x50] sm:$0xf]
        %v493 = vld [vmem:[%s347 + $0x54] sm:$0xf]
        %v494 = vld [vmem:[%s347 + $0x58] sm:$0xf]
        %v495 = vld [vmem:[%s347 + $0x5c] sm:$0xf]
        %v496 = vld [vmem:[%s347 + $0x60] sm:$0xf]
        %v497 = vld [vmem:[%s347 + $0x64] sm:$0xf]
        %v498 = vld [vmem:[%s347 + $0x68] sm:$0xf]
        %v499 = vld [vmem:[%s347 + $0x6c] sm:$0xf]
        %v500 = vld [vmem:[%s347 + $0x70] sm:$0xf]
        %v501 = vld [vmem:[%s347 + $0x74] sm:$0xf]
        %v502 = vld [vmem:[%s347 + $0x78] sm:$0xf]
        %v503 = vld [vmem:[%s347 + $0x7c] sm:$0xf]
        %v504 = vld [vmem:[%s347 + $0x80] sm:$0xf]
        %v505 = vld [vmem:[%s347 + $0x84] sm:$0xf]
        %v506 = vld [vmem:[%s347 + $0x88] sm:$0xf]
        %v507 = vld [vmem:[%s347 + $0x8c] sm:$0xf]
        %v508 = vld [vmem:[%s347 + $0x90] sm:$0xf]
        %v509 = vld [vmem:[%s347 + $0x94] sm:$0xf]
        %v510 = vld [vmem:[%s347 + $0x98] sm:$0xf]
        %v511 = vld [vmem:[%s347 + $0x9c] sm:$0xf]
        %v512 = vld [vmem:[%s347 + $0xa0] sm:$0xf]
        %v513 = vld [vmem:[%s347 + $0xa4] sm:$0xf]
        %v514 = vld [vmem:[%s347 + $0xa8] sm:$0xf]
        %v515 = vld [vmem:[%s347 + $0xac] sm:$0xf]
        %v516 = vld [vmem:[%s347 + $0xb0] sm:$0xf]
        %v517 = vld [vmem:[%s347 + $0xb4] sm:$0xf]
        %v518 = vld [vmem:[%s347 + $0xb8] sm:$0xf]
        %v519 = vld [vmem:[%s347 + $0xbc] sm:$0xf]
        %v520 = vld [vmem:[%s347 + $0xc0] sm:$0xf]
        %v521 = vld [vmem:[%s347 + $0xc4] sm:$0xf]
        %v522 = vld [vmem:[%s347 + $0xc8] sm:$0xf]
        %v523 = vld [vmem:[%s347 + $0xcc] sm:$0xf]
        %v524 = vld [vmem:[%s347 + $0xd0] sm:$0xf]
        %v525 = vld [vmem:[%s347 + $0xd4] sm:$0xf]
        %v526 = vld [vmem:[%s347 + $0xd8] sm:$0xf]
        %v527 = vld [vmem:[%s347 + $0xdc] sm:$0xf]
        %v528 = vld [vmem:[%s347 + $0xe0] sm:$0xf]
        %v529 = vld [vmem:[%s347 + $0xe4] sm:$0xf]
        %v530 = vld [vmem:[%s347 + $0xe8] sm:$0xf]
        %v531 = vld [vmem:[%s347 + $0xec] sm:$0xf]
        %v532 = vld [vmem:[%s347 + $0xf0] sm:$0xf]
        %v533 = vld [vmem:[%s347 + $0xf4] sm:$0xf]
        %v534 = vld [vmem:[%s347 + $0xf8] sm:$0xf]
        %v535 = vld [vmem:[%s347 + $0xfc] sm:$0xf]
        %v536 = vld [vmem:[%s347 + $0x100] sm:$0xf]
        %v537 = vld [vmem:[%s347 + $0x104] sm:$0xf]
        %v538 = vld [vmem:[%s347 + $0x108] sm:$0xf]
        %v539 = vld [vmem:[%s347 + $0x10c] sm:$0xf]
        %v540 = vld [vmem:[%s347 + $0x110] sm:$0xf]
        %v541 = vld [vmem:[%s347 + $0x114] sm:$0xf]
        %v542 = vld [vmem:[%s347 + $0x118] sm:$0xf]
        %v543 = vld [vmem:[%s347 + $0x11c] sm:$0xf]
        %v544 = vld [vmem:[%s347 + $0x120] sm:$0xf]
        %v545 = vld [vmem:[%s347 + $0x124] sm:$0xf]
        %v546 = vld [vmem:[%s347 + $0x128] sm:$0xf]
        %v547 = vld [vmem:[%s347 + $0x12c] sm:$0xf]
        %v548 = vld [vmem:[%s347 + $0x130] sm:$0xf]
        %v549 = vld [vmem:[%s347 + $0x134] sm:$0xf]
        %v550 = vld [vmem:[%s347 + $0x138] sm:$0xf]
        %v551 = vld [vmem:[%s347 + $0x13c] sm:$0xf]
        %v552 = vld [vmem:[%s347 + $0x140] sm:$0xf]
        %v553 = vld [vmem:[%s347 + $0x144] sm:$0xf]
        %v554 = vld [vmem:[%s347 + $0x148] sm:$0xf]
        %v555 = vld [vmem:[%s347 + $0x14c] sm:$0xf]
        %v556 = vld [vmem:[%s347 + $0x150] sm:$0xf]
        %v557 = vld [vmem:[%s347 + $0x154] sm:$0xf]
        %v558 = vld [vmem:[%s347 + $0x158] sm:$0xf]
        %v559 = vld [vmem:[%s347 + $0x15c] sm:$0xf]
        %v560 = vld [vmem:[%s347 + $0x160] sm:$0xf]
        %v561 = vld [vmem:[%s347 + $0x164] sm:$0xf]
        %v562 = vld [vmem:[%s347 + $0x168] sm:$0xf]
        %v563 = vld [vmem:[%s347 + $0x16c] sm:$0xf]
        %v564 = vld [vmem:[%s347 + $0x170] sm:$0xf]
        %v565 = vld [vmem:[%s347 + $0x174] sm:$0xf]
        %v566 = vld [vmem:[%s347 + $0x178] sm:$0xf]
        %v567 = vld [vmem:[%s347 + $0x17c] sm:$0xf]
        %v568 = vld [vmem:[%s347 + $0x180] sm:$0xf]
        %v569 = vld [vmem:[%s347 + $0x184] sm:$0xf]
        %v570 = vld [vmem:[%s347 + $0x188] sm:$0xf]
        %v571 = vld [vmem:[%s347 + $0x18c] sm:$0xf]
        %v572 = vld [vmem:[%s347 + $0x190] sm:$0xf]
        %v573 = vld [vmem:[%s347 + $0x194] sm:$0xf]
        %v574 = vld [vmem:[%s347 + $0x198] sm:$0xf]
        %v575 = vld [vmem:[%s347 + $0x19c] sm:$0xf]
        %v576 = vld [vmem:[%s347 + $0x1a0] sm:$0xf]
        %v577 = vld [vmem:[%s347 + $0x1a4] sm:$0xf]
        %v578 = vld [vmem:[%s347 + $0x1a8] sm:$0xf]
        %v579 = vld [vmem:[%s347 + $0x1ac] sm:$0xf]
        %v580 = vld [vmem:[%s347 + $0x1b0] sm:$0xf]
        %v581 = vld [vmem:[%s347 + $0x1b4] sm:$0xf]
        %v582 = vld [vmem:[%s347 + $0x1b8] sm:$0xf]
        %v583 = vld [vmem:[%s347 + $0x1bc] sm:$0xf]
        %v584 = vld [vmem:[%s420] sm:$0x1]
        %v586 = vlaneseq
        %v587 = vshrl.u32 %v586, 7
        %v588 = vsub.s32 0, %v587
        %v589 = vrot.slane %v584, %v588
        %v703 = vunpack.c.l.b16 %v472
        %v704 = vunpack.c.l.b16 %v473
        %v705 = vunpack.c.l.b16 %v474
        %v706 = vunpack.c.l.b16 %v475
        %v707 = vunpack.c.l.b16 %v476
        %v708 = vunpack.c.l.b16 %v477
        %v709 = vunpack.c.l.b16 %v478
        %v710 = vunpack.c.l.b16 %v479
        %v711 = vunpack.c.l.b16 %v480
        %v712 = vunpack.c.l.b16 %v481
        %v713 = vunpack.c.l.b16 %v482
        %v714 = vunpack.c.l.b16 %v483
        %v715 = vunpack.c.l.b16 %v484
        %v716 = vunpack.c.l.b16 %v485
        %v717 = vunpack.c.l.b16 %v486
        %v718 = vunpack.c.l.b16 %v487
        %v719 = vunpack.c.l.b16 %v488
        %v720 = vunpack.c.l.b16 %v489
        %v721 = vunpack.c.l.b16 %v490
        %v722 = vunpack.c.l.b16 %v491
        %v723 = vunpack.c.l.b16 %v492
        %v724 = vunpack.c.l.b16 %v493
        %v725 = vunpack.c.l.b16 %v494
        %v726 = vunpack.c.l.b16 %v495
        %v727 = vunpack.c.l.b16 %v496
        %v728 = vunpack.c.l.b16 %v497
        %v729 = vunpack.c.l.b16 %v498
        %v730 = vunpack.c.l.b16 %v499
        %v731 = vunpack.c.l.b16 %v500
        %v732 = vunpack.c.l.b16 %v501
        %v733 = vunpack.c.l.b16 %v502
        %v734 = vunpack.c.l.b16 %v503
        %v735 = vunpack.c.l.b16 %v504
        %v736 = vunpack.c.l.b16 %v505
        %v737 = vunpack.c.l.b16 %v506
        %v738 = vunpack.c.l.b16 %v507
        %v739 = vunpack.c.l.b16 %v508
        %v740 = vunpack.c.l.b16 %v509
        %v741 = vunpack.c.l.b16 %v510
        %v742 = vunpack.c.l.b16 %v511
        %v743 = vunpack.c.l.b16 %v512
        %v744 = vunpack.c.l.b16 %v513
        %v745 = vunpack.c.l.b16 %v514
        %v746 = vunpack.c.l.b16 %v515
        %v747 = vunpack.c.l.b16 %v516
        %v748 = vunpack.c.l.b16 %v517
        %v749 = vunpack.c.l.b16 %v518
        %v750 = vunpack.c.l.b16 %v519
        %v751 = vunpack.c.l.b16 %v520
        %v752 = vunpack.c.l.b16 %v521
        %v753 = vunpack.c.l.b16 %v522
        %v754 = vunpack.c.l.b16 %v523
        %v755 = vunpack.c.l.b16 %v524
        %v756 = vunpack.c.l.b16 %v525
        %v757 = vunpack.c.l.b16 %v526
        %v758 = vunpack.c.l.b16 %v527
        %v759 = vunpack.c.l.b16 %v528
        %v760 = vunpack.c.l.b16 %v529
        %v761 = vunpack.c.l.b16 %v530
        %v762 = vunpack.c.l.b16 %v531
        %v763 = vunpack.c.l.b16 %v532
        %v764 = vunpack.c.l.b16 %v533
        %v765 = vunpack.c.l.b16 %v534
        %v766 = vunpack.c.l.b16 %v535
        %v767 = vunpack.c.l.b16 %v536
        %v768 = vunpack.c.l.b16 %v537
        %v769 = vunpack.c.l.b16 %v538
        %v770 = vunpack.c.l.b16 %v539
        %v771 = vunpack.c.l.b16 %v540
        %v772 = vunpack.c.l.b16 %v541
        %v773 = vunpack.c.l.b16 %v542
        %v774 = vunpack.c.l.b16 %v543
        %v775 = vunpack.c.l.b16 %v544
        %v776 = vunpack.c.l.b16 %v545
        %v777 = vunpack.c.l.b16 %v546
        %v778 = vunpack.c.l.b16 %v547
        %v779 = vunpack.c.l.b16 %v548
        %v780 = vunpack.c.l.b16 %v549
        %v781 = vunpack.c.l.b16 %v550
        %v782 = vunpack.c.l.b16 %v551
        %v783 = vunpack.c.l.b16 %v552
        %v784 = vunpack.c.l.b16 %v553
        %v785 = vunpack.c.l.b16 %v554
        %v786 = vunpack.c.l.b16 %v555
        %v787 = vunpack.c.l.b16 %v556
        %v788 = vunpack.c.l.b16 %v557
        %v789 = vunpack.c.l.b16 %v558
        %v790 = vunpack.c.l.b16 %v559
        %v791 = vunpack.c.l.b16 %v560
        %v792 = vunpack.c.l.b16 %v561
        %v793 = vunpack.c.l.b16 %v562
        %v794 = vunpack.c.l.b16 %v563
        %v795 = vunpack.c.l.b16 %v564
        %v796 = vunpack.c.l.b16 %v565
        %v797 = vunpack.c.l.b16 %v566
        %v798 = vunpack.c.l.b16 %v567
        %v799 = vunpack.c.l.b16 %v568
        %v800 = vunpack.c.l.b16 %v569
        %v801 = vunpack.c.l.b16 %v570
        %v802 = vunpack.c.l.b16 %v571
        %v803 = vunpack.c.l.b16 %v572
        %v804 = vunpack.c.l.b16 %v573
        %v805 = vunpack.c.l.b16 %v574
        %v806 = vunpack.c.l.b16 %v575
        %v807 = vunpack.c.l.b16 %v576
        %v808 = vunpack.c.l.b16 %v577
        %v809 = vunpack.c.l.b16 %v578
        %v810 = vunpack.c.l.b16 %v579
        %v811 = vunpack.c.l.b16 %v580
        %v812 = vunpack.c.l.b16 %v581
        %v813 = vunpack.c.l.b16 %v582
        %v814 = vunpack.c.l.b16 %v583
        %v815 = vpack.c.b16 %v704, %v703
        %v816 = vpack.c.b16 %v706, %v705
        %v817 = vpack.c.b16 %v708, %v707
        %v818 = vpack.c.b16 %v710, %v709
        %v819 = vpack.c.b16 %v712, %v711
        %v820 = vpack.c.b16 %v714, %v713
        %v821 = vpack.c.b16 %v716, %v715
        %v822 = vpack.c.b16 %v718, %v717
        %v823 = vpack.c.b16 %v720, %v719
        %v824 = vpack.c.b16 %v722, %v721
        %v825 = vpack.c.b16 %v724, %v723
        %v826 = vpack.c.b16 %v726, %v725
        %v827 = vpack.c.b16 %v728, %v727
        %v828 = vpack.c.b16 %v730, %v729
        %v829 = vpack.c.b16 %v732, %v731
        %v830 = vpack.c.b16 %v734, %v733
        %v831 = vpack.c.b16 %v736, %v735
        %v832 = vpack.c.b16 %v738, %v737
        %v833 = vpack.c.b16 %v740, %v739
        %v834 = vpack.c.b16 %v742, %v741
        %v835 = vpack.c.b16 %v744, %v743
        %v836 = vpack.c.b16 %v746, %v745
        %v837 = vpack.c.b16 %v748, %v747
        %v838 = vpack.c.b16 %v750, %v749
        %v839 = vpack.c.b16 %v752, %v751
        %v840 = vpack.c.b16 %v754, %v753
        %v841 = vpack.c.b16 %v756, %v755
        %v842 = vpack.c.b16 %v758, %v757
        %v843 = vpack.c.b16 %v760, %v759
        %v844 = vpack.c.b16 %v762, %v761
        %v845 = vpack.c.b16 %v764, %v763
        %v846 = vpack.c.b16 %v766, %v765
        %v847 = vpack.c.b16 %v768, %v767
        %v848 = vpack.c.b16 %v770, %v769
        %v849 = vpack.c.b16 %v772, %v771
        %v850 = vpack.c.b16 %v774, %v773
        %v851 = vpack.c.b16 %v776, %v775
        %v852 = vpack.c.b16 %v778, %v777
        %v853 = vpack.c.b16 %v780, %v779
        %v854 = vpack.c.b16 %v782, %v781
        %v855 = vpack.c.b16 %v784, %v783
        %v856 = vpack.c.b16 %v786, %v785
        %v857 = vpack.c.b16 %v788, %v787
        %v858 = vpack.c.b16 %v790, %v789
        %v859 = vpack.c.b16 %v792, %v791
        %v860 = vpack.c.b16 %v794, %v793
        %v861 = vpack.c.b16 %v796, %v795
        %v862 = vpack.c.b16 %v798, %v797
        %v863 = vpack.c.b16 %v800, %v799
        %v864 = vpack.c.b16 %v802, %v801
        %v865 = vpack.c.b16 %v804, %v803
        %v866 = vpack.c.b16 %v806, %v805
        %v867 = vpack.c.b16 %v808, %v807
        %v868 = vpack.c.b16 %v810, %v809
        %v869 = vpack.c.b16 %v812, %v811
        %v870 = vpack.c.b16 %v814, %v813
        %927 = vmatprep.subr.bf16.mxu0 0
        %928 = vmatpush1.bf16.msra.mxu0 %v815
        %929 = vmatprep.subr.bf16.mxu0 0
        %930 = vmatpush1.bf16.msra.mxu0 %v816
        %931 = vmatprep.subr.bf16.mxu0 0
        %932 = vmatpush1.bf16.msra.mxu0 %v817
        %933 = vmatprep.subr.bf16.mxu0 0
        %934 = vmatpush1.bf16.msra.mxu0 %v818
        %935 = vmatprep.subr.bf16.mxu0 0
        %936 = vmatpush1.bf16.msra.mxu0 %v819
        %937 = vmatprep.subr.bf16.mxu0 0
        %938 = vmatpush1.bf16.msra.mxu0 %v820
        %939 = vmatprep.subr.bf16.mxu0 0
        %940 = vmatpush1.bf16.msra.mxu0 %v821
        %941 = vmatprep.subr.bf16.mxu0 0
        %942 = vmatpush1.bf16.msra.mxu0 %v822
        %943 = vmatprep.subr.bf16.mxu0 0
        %944 = vmatpush1.bf16.msra.mxu0 %v823
        %945 = vmatprep.subr.bf16.mxu0 0
        %946 = vmatpush1.bf16.msra.mxu0 %v824
        %947 = vmatprep.subr.bf16.mxu0 0
        %948 = vmatpush1.bf16.msra.mxu0 %v825
        %949 = vmatprep.subr.bf16.mxu0 0
        %950 = vmatpush1.bf16.msra.mxu0 %v826
        %951 = vmatprep.subr.bf16.mxu0 0
        %952 = vmatpush1.bf16.msra.mxu0 %v827
        %953 = vmatprep.subr.bf16.mxu0 0
        %954 = vmatpush1.bf16.msra.mxu0 %v828
        %955 = vmatprep.subr.bf16.mxu0 0
        %956 = vmatpush1.bf16.msra.mxu0 %v829
        %957 = vmatprep.subr.bf16.mxu0 0
        %958 = vmatpush1.bf16.msra.mxu0 %v830
        %959 = vmatprep.mubr.bf16.mxu0 %v466
        %960 = vmatmul.mubr.bf16.gmra.mrb[0].mxu0 %v465
        %v961 = vpop.f32.mrb[0].mxu0
        %v962 = vadd.f32 %v589, %v961
        %v963 = vpop.f32.mrb[0].mxu0
        %v964 = vpop.f32.mrb[0].mxu0
        %v965 = vpop.f32.mrb[0].mxu0
        %966 = vdwg.mxu0
        %967 = vmatprep.subr.bf16.mxu0 0
        %968 = vmatpush1.bf16.msra.mxu0 %v831
        %969 = vmatprep.subr.bf16.mxu0 0
        %970 = vmatpush1.bf16.msra.mxu0 %v832
        %971 = vmatprep.subr.bf16.mxu0 0
        %972 = vmatpush1.bf16.msra.mxu0 %v833
        %973 = vmatprep.subr.bf16.mxu0 0
        %974 = vmatpush1.bf16.msra.mxu0 %v834
        %975 = vmatprep.subr.bf16.mxu0 0
        %976 = vmatpush1.bf16.msra.mxu0 %v835
        %977 = vmatprep.subr.bf16.mxu0 0
        %978 = vmatpush1.bf16.msra.mxu0 %v836
        %979 = vmatprep.subr.bf16.mxu0 0
        %980 = vmatpush1.bf16.msra.mxu0 %v837
        %981 = vmatprep.subr.bf16.mxu0 0
        %982 = vmatpush1.bf16.msra.mxu0 %v838
        %983 = vmatprep.subr.bf16.mxu0 0
        %984 = vmatpush1.bf16.msra.mxu0 %v839
        %985 = vmatprep.subr.bf16.mxu0 0
        %986 = vmatpush1.bf16.msra.mxu0 %v840
        %987 = vmatprep.subr.bf16.mxu0 0
        %988 = vmatpush1.bf16.msra.mxu0 %v841
        %989 = vmatprep.subr.bf16.mxu0 0
        %990 = vmatpush1.bf16.msra.mxu0 %v842
        %991 = vmatprep.subr.bf16.mxu0 0
        %992 = vmatpush1.bf16.msra.mxu0 %v843
        %993 = vmatprep.subr.bf16.mxu0 0
        %994 = vmatpush1.bf16.msra.mxu0 %v844
        %995 = vmatprep.subr.bf16.mxu0 0
        %996 = vmatpush1.bf16.msra.mxu0 %v845
        %997 = vmatprep.subr.bf16.mxu0 0
        %998 = vmatpush1.bf16.msra.mxu0 %v846
        %999 = vmatprep.mubr.bf16.mxu0 %v468
        %1000 = vmatmul.mubr.bf16.gmra.mrb[0].mxu0 %v467
        %v1001 = vpop.f32.mrb[0].mxu0
        %v1002 = vadd.f32 %v962, %v1001
        %v1003 = vpop.f32.mrb[0].mxu0
        %v1004 = vpop.f32.mrb[0].mxu0
        %v1005 = vpop.f32.mrb[0].mxu0
        %1006 = vdwg.mxu0
        %1007 = vmatprep.subr.bf16.mxu0 0
        %1008 = vmatpush1.bf16.msra.mxu0 %v847
        %1009 = vmatprep.subr.bf16.mxu0 0
        %1010 = vmatpush1.bf16.msra.mxu0 %v848
        %1011 = vmatprep.subr.bf16.mxu0 0
        %1012 = vmatpush1.bf16.msra.mxu0 %v849
        %1013 = vmatprep.subr.bf16.mxu0 0
        %1014 = vmatpush1.bf16.msra.mxu0 %v850
        %1015 = vmatprep.subr.bf16.mxu0 0
        %1016 = vmatpush1.bf16.msra.mxu0 %v851
        %1017 = vmatprep.subr.bf16.mxu0 0
        %1018 = vmatpush1.bf16.msra.mxu0 %v852
        %1019 = vmatprep.subr.bf16.mxu0 0
        %1020 = vmatpush1.bf16.msra.mxu0 %v853
        %1021 = vmatprep.subr.bf16.mxu0 0
        %1022 = vmatpush1.bf16.msra.mxu0 %v854
        %1023 = vmatprep.subr.bf16.mxu0 0
        %1024 = vmatpush1.bf16.msra.mxu0 %v855
        %1025 = vmatprep.subr.bf16.mxu0 0
        %1026 = vmatpush1.bf16.msra.mxu0 %v856
        %1027 = vmatprep.subr.bf16.mxu0 0
        %1028 = vmatpush1.bf16.msra.mxu0 %v857
        %1029 = vmatprep.subr.bf16.mxu0 0
        %1030 = vmatpush1.bf16.msra.mxu0 %v858
        %1031 = vmatprep.subr.bf16.mxu0 0
        %1032 = vmatpush1.bf16.msra.mxu0 %v859
        %1033 = vmatprep.subr.bf16.mxu0 0
        %1034 = vmatpush1.bf16.msra.mxu0 %v860
        %1035 = vmatprep.subr.bf16.mxu0 0
        %1036 = vmatpush1.bf16.msra.mxu0 %v861
        %1037 = vmatprep.subr.bf16.mxu0 0
        %1038 = vmatpush1.bf16.msra.mxu0 %v862
        %1039 = vmatprep.mubr.bf16.mxu0 %v470
        %1040 = vmatmul.mubr.bf16.gmra.mrb[0].mxu0 %v469
        %v1041 = vpop.f32.mrb[0].mxu0
        %v1042 = vadd.f32 %v1002, %v1041
        %v1043 = vpop.f32.mrb[0].mxu0
        %v1044 = vpop.f32.mrb[0].mxu0
        %v1045 = vpop.f32.mrb[0].mxu0
        %1046 = vdwg.mxu0
        %1047 = vmatprep.subr.bf16.mxu0 0
        %1048 = vmatpush1.bf16.msra.mxu0 %v863
        %1049 = vmatprep.subr.bf16.mxu0 0
        %1050 = vmatpush1.bf16.msra.mxu0 %v864
        %1051 = vmatprep.subr.bf16.mxu0 0
        %1052 = vmatpush1.bf16.msra.mxu0 %v865
        %1053 = vmatprep.subr.bf16.mxu0 0
        %1054 = vmatpush1.bf16.msra.mxu0 %v866
        %1055 = vmatprep.subr.bf16.mxu0 0
        %1056 = vmatpush1.bf16.msra.mxu0 %v867
        %1057 = vmatprep.subr.bf16.mxu0 0
        %1058 = vmatpush1.bf16.msra.mxu0 %v868
        %1059 = vmatprep.subr.bf16.mxu0 0
        %1060 = vmatpush1.bf16.msra.mxu0 %v869
        %1061 = vmatprep.subr.bf16.mxu0 0
        %1062 = vmatpush1.bf16.msra.mxu0 %v870
        %1063 = vmatprep.subr.bf16.mxu0 0
        %1064 = vmatpush1.bf16.msra.mxu0 0
        %1065 = vmatprep.subr.bf16.mxu0 0
        %1066 = vmatpush1.bf16.msra.mxu0 0
        %1067 = vmatprep.subr.bf16.mxu0 0
        %1068 = vmatpush1.bf16.msra.mxu0 0
        %1069 = vmatprep.subr.bf16.mxu0 0
        %1070 = vmatpush1.bf16.msra.mxu0 0
        %1071 = vmatprep.subr.bf16.mxu0 0
        %1072 = vmatpush1.bf16.msra.mxu0 0
        %1073 = vmatprep.subr.bf16.mxu0 0
        %1074 = vmatpush1.bf16.msra.mxu0 0
        %1075 = vmatprep.subr.bf16.mxu0 0
        %1076 = vmatpush1.bf16.msra.mxu0 0
        %1077 = vmatprep.subr.bf16.mxu0 0
        %1078 = vmatpush1.bf16.msra.mxu0 0
        %1079 = vmatprep.mubr.bf16.mxu0 0
        %1080 = vmatmul.mubr.bf16.gmra.mrb[0].mxu0 %v471
        %v1081 = vpop.f32.mrb[0].mxu0
        %v1082 = vadd.f32 %v1042, %v1081
        %v1083 = vpop.f32.mrb[0].mxu0
        %v1084 = vpop.f32.mrb[0].mxu0
        %v1085 = vpop.f32.mrb[0].mxu0
        %1086 = vdwg.mxu0
        %v1087 = vmax.f32 %v1082, 0.0
        %v1088 = vpack.c.bf16 %v1087, %v1087
        %v1089 = vld [vmem:[%s425] sm:$0xff]
        %v1090 = vld [vmem:[%s425 + $0x8] sm:$0xff]
        %v1091 = vld [vmem:[%s425 + $0x10] sm:$0xff]
        %v1092 = vld [vmem:[%s425 + $0x18] sm:$0xff]
        %v1093 = vld [vmem:[%s425 + $0x20] sm:$0xff]
        %v1094 = vld [vmem:[%s425 + $0x28] sm:$0xff]
        %v1095 = vld [vmem:[%s425 + $0x30] sm:$0xff]
        %v1096 = vld [vmem:[%s425 + $0x38] sm:$0xff]
        %v1097 = vld [vmem:[%s425 + $0x40] sm:$0xff]
        %v1098 = vld [vmem:[%s425 + $0x48] sm:$0xff]
        %v1099 = vld [vmem:[%s425 + $0x50] sm:$0xff]
        %v1100 = vld [vmem:[%s425 + $0x58] sm:$0xff]
        %v1101 = vld [vmem:[%s425 + $0x60] sm:$0xff]
        %v1102 = vld [vmem:[%s425 + $0x68] sm:$0xff]
        %v1103 = vld [vmem:[%s425 + $0x70] sm:$0xff]
        %v1104 = vld [vmem:[%s425 + $0x78] sm:$0xff]
        %v1105 = vld [vmem:[%s429] sm:$0x3]
        %v1107 = vlaneseq
        %v1108 = vshrl.u32 %v1107, 7
        %v1109 = vsub.s32 0, %v1108
        %v1110 = vrot.slane %v1105, %v1109
        %v1111 = vlaneseq
        %v1112 = vshrl.u32 %v1111, 7
        %v1113 = vsub.s32 1, %v1112
        %v1114 = vrot.slane %v1105, %v1113
        %v1133 = vunpack.c.l.b16 %v1089
        %v1134 = vunpack.c.h.b16 %v1089
        %v1135 = vunpack.c.l.b16 %v1090
        %v1136 = vunpack.c.h.b16 %v1090
        %v1137 = vunpack.c.l.b16 %v1091
        %v1138 = vunpack.c.h.b16 %v1091
        %v1139 = vunpack.c.l.b16 %v1092
        %v1140 = vunpack.c.h.b16 %v1092
        %v1141 = vunpack.c.l.b16 %v1093
        %v1142 = vunpack.c.h.b16 %v1093
        %v1143 = vunpack.c.l.b16 %v1094
        %v1144 = vunpack.c.h.b16 %v1094
        %v1145 = vunpack.c.l.b16 %v1095
        %v1146 = vunpack.c.h.b16 %v1095
        %v1147 = vunpack.c.l.b16 %v1096
        %v1148 = vunpack.c.h.b16 %v1096
        %v1149 = vunpack.c.l.b16 %v1097
        %v1150 = vunpack.c.h.b16 %v1097
        %v1151 = vunpack.c.l.b16 %v1098
        %v1152 = vunpack.c.h.b16 %v1098
        %v1153 = vunpack.c.l.b16 %v1099
        %v1154 = vunpack.c.h.b16 %v1099
        %v1155 = vunpack.c.l.b16 %v1100
        %v1156 = vunpack.c.h.b16 %v1100
        %v1157 = vunpack.c.l.b16 %v1101
        %v1158 = vunpack.c.h.b16 %v1101
        %v1159 = vunpack.c.l.b16 %v1102
        %v1160 = vunpack.c.h.b16 %v1102
        %v1161 = vunpack.c.l.b16 %v1103
        %v1162 = vunpack.c.h.b16 %v1103
        %v1163 = vunpack.c.l.b16 %v1104
        %v1164 = vunpack.c.h.b16 %v1104
        %v1165 = vpack.c.b16 %v1135, %v1133
        %v1166 = vpack.c.b16 %v1136, %v1134
        %v1167 = vpack.c.b16 %v1139, %v1137
        %v1168 = vpack.c.b16 %v1140, %v1138
        %v1169 = vpack.c.b16 %v1143, %v1141
        %v1170 = vpack.c.b16 %v1144, %v1142
        %v1171 = vpack.c.b16 %v1147, %v1145
        %v1172 = vpack.c.b16 %v1148, %v1146
        %v1173 = vpack.c.b16 %v1151, %v1149
        %v1174 = vpack.c.b16 %v1152, %v1150
        %v1175 = vpack.c.b16 %v1155, %v1153
        %v1176 = vpack.c.b16 %v1156, %v1154
        %v1177 = vpack.c.b16 %v1159, %v1157
        %v1178 = vpack.c.b16 %v1160, %v1158
        %v1179 = vpack.c.b16 %v1163, %v1161
        %v1180 = vpack.c.b16 %v1164, %v1162
        %1197 = vmatprep.subr.bf16.mxu0 %v1166
        %1198 = vmatpush1.bf16.msra.mxu0 %v1165
        %1199 = vmatprep.subr.bf16.mxu0 %v1168
        %1200 = vmatpush1.bf16.msra.mxu0 %v1167
        %1201 = vmatprep.subr.bf16.mxu0 %v1170
        %1202 = vmatpush1.bf16.msra.mxu0 %v1169
        %1203 = vmatprep.subr.bf16.mxu0 %v1172
        %1204 = vmatpush1.bf16.msra.mxu0 %v1171
        %1205 = vmatprep.subr.bf16.mxu0 %v1174
        %1206 = vmatpush1.bf16.msra.mxu0 %v1173
        %1207 = vmatprep.subr.bf16.mxu0 %v1176
        %1208 = vmatpush1.bf16.msra.mxu0 %v1175
        %1209 = vmatprep.subr.bf16.mxu0 %v1178
        %1210 = vmatpush1.bf16.msra.mxu0 %v1177
        %1211 = vmatprep.subr.bf16.mxu0 %v1180
        %1212 = vmatpush1.bf16.msra.mxu0 %v1179
        %1213 = vmatprep.subr.bf16.mxu0 0
        %1214 = vmatpush1.bf16.msra.mxu0 0
        %1215 = vmatprep.subr.bf16.mxu0 0
        %1216 = vmatpush1.bf16.msra.mxu0 0
        %1217 = vmatprep.subr.bf16.mxu0 0
        %1218 = vmatpush1.bf16.msra.mxu0 0
        %1219 = vmatprep.subr.bf16.mxu0 0
        %1220 = vmatpush1.bf16.msra.mxu0 0
        %1221 = vmatprep.subr.bf16.mxu0 0
        %1222 = vmatpush1.bf16.msra.mxu0 0
        %1223 = vmatprep.subr.bf16.mxu0 0
        %1224 = vmatpush1.bf16.msra.mxu0 0
        %1225 = vmatprep.subr.bf16.mxu0 0
        %1226 = vmatpush1.bf16.msra.mxu0 0
        %1227 = vmatprep.subr.bf16.mxu0 0
        %1228 = vmatpush1.bf16.msra.mxu0 0
        %1229 = vmatprep.mubr.bf16.mxu0 0
        %1230 = vmatmul.mubr.bf16.gmra.mrb[0].mxu0 %v1088
        %v1231 = vpop.f32.mrb[0].mxu0
        %v1232 = vadd.f32 %v1110, %v1231
        %v1233 = vpop.f32.mrb[0].mxu0
        %v1234 = vadd.f32 %v1114, %v1233
        %v1235 = vpop.f32.mrb[0].mxu0
        %v1236 = vpop.f32.mrb[0].mxu0
        %1237 = vdwg.mxu0
        %v1238 = vmax.f32 %v1232, 0.0
        %v1239 = vmax.f32 %v1234, 0.0
        %v1240 = vpack.c.bf16 %v1238, %v1238
        %v1241 = vpack.c.bf16 %v1239, %v1239
        %v1242 = vld [vmem:[%s356] sm:$0xff]
        %v1243 = vld [vmem:[%s356 + $0x8] sm:$0xff]
        %v1244 = vld [vmem:[%s356 + $0x10] sm:$0xff]
        %v1245 = vld [vmem:[%s356 + $0x18] sm:$0xf]
        %v1246 = vld [vmem:[%s356 + $0x1c] sm:$0xff]
        %v1247 = vld [vmem:[%s356 + $0x24] sm:$0xff]
        %v1248 = vld [vmem:[%s356 + $0x2c] sm:$0xff]
        %v1249 = vld [vmem:[%s356 + $0x34] sm:$0xf]
        %v1250 = vld [vmem:[%s356 + $0x38] sm:$0xff]
        %v1251 = vld [vmem:[%s356 + $0x40] sm:$0xff]
        %v1252 = vld [vmem:[%s356 + $0x48] sm:$0xff]
        %v1253 = vld [vmem:[%s356 + $0x50] sm:$0xf]
        %v1254 = vld [vmem:[%s356 + $0x54] sm:$0xff]
        %v1255 = vld [vmem:[%s356 + $0x5c] sm:$0xff]
        %v1256 = vld [vmem:[%s356 + $0x64] sm:$0xff]
        %v1257 = vld [vmem:[%s356 + $0x6c] sm:$0xf]
        %v1258 = vld [vmem:[%s356 + $0x70] sm:$0xff]
        %v1259 = vld [vmem:[%s356 + $0x78] sm:$0xff]
        %v1260 = vld [vmem:[%s356 + $0x80] sm:$0xff]
        %v1261 = vld [vmem:[%s356 + $0x88] sm:$0xf]
        %v1262 = vld [vmem:[%s356 + $0x8c] sm:$0xff]
        %v1263 = vld [vmem:[%s356 + $0x94] sm:$0xff]
        %v1264 = vld [vmem:[%s356 + $0x9c] sm:$0xff]
        %v1265 = vld [vmem:[%s356 + $0xa4] sm:$0xf]
        %v1266 = vld [vmem:[%s356 + $0xa8] sm:$0xff]
        %v1267 = vld [vmem:[%s356 + $0xb0] sm:$0xff]
        %v1268 = vld [vmem:[%s356 + $0xb8] sm:$0xff]
        %v1269 = vld [vmem:[%s356 + $0xc0] sm:$0xf]
        %v1270 = vld [vmem:[%s356 + $0xc4] sm:$0xff]
        %v1271 = vld [vmem:[%s356 + $0xcc] sm:$0xff]
        %v1272 = vld [vmem:[%s356 + $0xd4] sm:$0xff]
        %v1273 = vld [vmem:[%s356 + $0xdc] sm:$0xf]
        %v1274 = vld [vmem:[%s356 + $0xe0] sm:$0xff]
        %v1275 = vld [vmem:[%s356 + $0xe8] sm:$0xff]
        %v1276 = vld [vmem:[%s356 + $0xf0] sm:$0xff]
        %v1277 = vld [vmem:[%s356 + $0xf8] sm:$0xf]
        %v1278 = vld [vmem:[%s356 + $0xfc] sm:$0xff]
        %v1279 = vld [vmem:[%s356 + $0x104] sm:$0xff]
        %v1280 = vld [vmem:[%s356 + $0x10c] sm:$0xff]
        %v1281 = vld [vmem:[%s356 + $0x114] sm:$0xf]
        %v1282 = vld [vmem:[%s356 + $0x118] sm:$0xff]
        %v1283 = vld [vmem:[%s356 + $0x120] sm:$0xff]
        %v1284 = vld [vmem:[%s356 + $0x128] sm:$0xff]
        %v1285 = vld [vmem:[%s356 + $0x130] sm:$0xf]
        %v1286 = vld [vmem:[%s356 + $0x134] sm:$0xff]
        %v1287 = vld [vmem:[%s356 + $0x13c] sm:$0xff]
        %v1288 = vld [vmem:[%s356 + $0x144] sm:$0xff]
        %v1289 = vld [vmem:[%s356 + $0x14c] sm:$0xf]
        %v1290 = vld [vmem:[%s356 + $0x150] sm:$0xff]
        %v1291 = vld [vmem:[%s356 + $0x158] sm:$0xff]
        %v1292 = vld [vmem:[%s356 + $0x160] sm:$0xff]
        %v1293 = vld [vmem:[%s356 + $0x168] sm:$0xf]
        %v1294 = vld [vmem:[%s356 + $0x16c] sm:$0xff]
        %v1295 = vld [vmem:[%s356 + $0x174] sm:$0xff]
        %v1296 = vld [vmem:[%s356 + $0x17c] sm:$0xff]
        %v1297 = vld [vmem:[%s356 + $0x184] sm:$0xf]
        %v1298 = vld [vmem:[%s356 + $0x188] sm:$0xff]
        %v1299 = vld [vmem:[%s356 + $0x190] sm:$0xff]
        %v1300 = vld [vmem:[%s356 + $0x198] sm:$0xff]
        %v1301 = vld [vmem:[%s356 + $0x1a0] sm:$0xf]
        %v1302 = vld [vmem:[%s356 + $0x1a4] sm:$0xff]
        %v1303 = vld [vmem:[%s356 + $0x1ac] sm:$0xff]
        %v1304 = vld [vmem:[%s356 + $0x1b4] sm:$0xff]
        %v1305 = vld [vmem:[%s356 + $0x1bc] sm:$0xf]
        %v1306 = vld [vmem:[%s356 + $0x1c0] sm:$0xff]
        %v1307 = vld [vmem:[%s356 + $0x1c8] sm:$0xff]
        %v1308 = vld [vmem:[%s356 + $0x1d0] sm:$0xff]
        %v1309 = vld [vmem:[%s356 + $0x1d8] sm:$0xf]
        %v1310 = vld [vmem:[%s356 + $0x1dc] sm:$0xff]
        %v1311 = vld [vmem:[%s356 + $0x1e4] sm:$0xff]
        %v1312 = vld [vmem:[%s356 + $0x1ec] sm:$0xff]
        %v1313 = vld [vmem:[%s356 + $0x1f4] sm:$0xf]
        %v1314 = vld [vmem:[%s356 + $0x1f8] sm:$0xff]
        %v1315 = vld [vmem:[%s356 + $0x200] sm:$0xff]
        %v1316 = vld [vmem:[%s356 + $0x208] sm:$0xff]
        %v1317 = vld [vmem:[%s356 + $0x210] sm:$0xf]
        %v1318 = vld [vmem:[%s356 + $0x214] sm:$0xff]
        %v1319 = vld [vmem:[%s356 + $0x21c] sm:$0xff]
        %v1320 = vld [vmem:[%s356 + $0x224] sm:$0xff]
        %v1321 = vld [vmem:[%s356 + $0x22c] sm:$0xf]
        %v1322 = vld [vmem:[%s356 + $0x230] sm:$0xff]
        %v1323 = vld [vmem:[%s356 + $0x238] sm:$0xff]
        %v1324 = vld [vmem:[%s356 + $0x240] sm:$0xff]
        %v1325 = vld [vmem:[%s356 + $0x248] sm:$0xf]
        %v1326 = vld [vmem:[%s356 + $0x24c] sm:$0xff]
        %v1327 = vld [vmem:[%s356 + $0x254] sm:$0xff]
        %v1328 = vld [vmem:[%s356 + $0x25c] sm:$0xff]
        %v1329 = vld [vmem:[%s356 + $0x264] sm:$0xf]
        %v1330 = vld [vmem:[%s356 + $0x268] sm:$0xff]
        %v1331 = vld [vmem:[%s356 + $0x270] sm:$0xff]
        %v1332 = vld [vmem:[%s356 + $0x278] sm:$0xff]
        %v1333 = vld [vmem:[%s356 + $0x280] sm:$0xf]
        %v1334 = vld [vmem:[%s356 + $0x284] sm:$0xff]
        %v1335 = vld [vmem:[%s356 + $0x28c] sm:$0xff]
        %v1336 = vld [vmem:[%s356 + $0x294] sm:$0xff]
        %v1337 = vld [vmem:[%s356 + $0x29c] sm:$0xf]
        %v1338 = vld [vmem:[%s356 + $0x2a0] sm:$0xff]
        %v1339 = vld [vmem:[%s356 + $0x2a8] sm:$0xff]
        %v1340 = vld [vmem:[%s356 + $0x2b0] sm:$0xff]
        %v1341 = vld [vmem:[%s356 + $0x2b8] sm:$0xf]
        %v1342 = vld [vmem:[%s356 + $0x2bc] sm:$0xff]
        %v1343 = vld [vmem:[%s356 + $0x2c4] sm:$0xff]
        %v1344 = vld [vmem:[%s356 + $0x2cc] sm:$0xff]
        %v1345 = vld [vmem:[%s356 + $0x2d4] sm:$0xf]
        %v1346 = vld [vmem:[%s356 + $0x2d8] sm:$0xff]
        %v1347 = vld [vmem:[%s356 + $0x2e0] sm:$0xff]
        %v1348 = vld [vmem:[%s356 + $0x2e8] sm:$0xff]
        %v1349 = vld [vmem:[%s356 + $0x2f0] sm:$0xf]
        %v1350 = vld [vmem:[%s356 + $0x2f4] sm:$0xff]
        %v1351 = vld [vmem:[%s356 + $0x2fc] sm:$0xff]
        %v1352 = vld [vmem:[%s356 + $0x304] sm:$0xff]
        %v1353 = vld [vmem:[%s356 + $0x30c] sm:$0xf]
        %v1354 = vld [vmem:[%s356 + $0x310] sm:$0xff]
        %v1355 = vld [vmem:[%s356 + $0x318] sm:$0xff]
        %v1356 = vld [vmem:[%s356 + $0x320] sm:$0xff]
        %v1357 = vld [vmem:[%s356 + $0x328] sm:$0xf]
        %v1358 = vld [vmem:[%s356 + $0x32c] sm:$0xff]
        %v1359 = vld [vmem:[%s356 + $0x334] sm:$0xff]
        %v1360 = vld [vmem:[%s356 + $0x33c] sm:$0xff]
        %v1361 = vld [vmem:[%s356 + $0x344] sm:$0xf]
        %v1362 = vld [vmem:[%s356 + $0x348] sm:$0xff]
        %v1363 = vld [vmem:[%s356 + $0x350] sm:$0xff]
        %v1364 = vld [vmem:[%s356 + $0x358] sm:$0xff]
        %v1365 = vld [vmem:[%s356 + $0x360] sm:$0xf]
        %v1366 = vld [vmem:[%s356 + $0x364] sm:$0xff]
        %v1367 = vld [vmem:[%s356 + $0x36c] sm:$0xff]
        %v1368 = vld [vmem:[%s356 + $0x374] sm:$0xff]
        %v1369 = vld [vmem:[%s356 + $0x37c] sm:$0xf]
        %v1370 = vld [vmem:[%s433] sm:$0xff]
        %v1372 = vlaneseq
        %v1373 = vshrl.u32 %v1372, 7
        %v1374 = vsub.s32 0, %v1373
        %v1375 = vrot.slane %v1370, %v1374
        %v1376 = vlaneseq
        %v1377 = vshrl.u32 %v1376, 7
        %v1378 = vsub.s32 1, %v1377
        %v1379 = vrot.slane %v1370, %v1378
        %v1380 = vlaneseq
        %v1381 = vshrl.u32 %v1380, 7
        %v1382 = vsub.s32 2, %v1381
        %v1383 = vrot.slane %v1370, %v1382
        %v1384 = vlaneseq
        %v1385 = vshrl.u32 %v1384, 7
        %v1386 = vsub.s32 3, %v1385
        %v1387 = vrot.slane %v1370, %v1386
        %v1388 = vlaneseq
        %v1389 = vshrl.u32 %v1388, 7
        %v1390 = vsub.s32 4, %v1389
        %v1391 = vrot.slane %v1370, %v1390
        %v1392 = vlaneseq
        %v1393 = vshrl.u32 %v1392, 7
        %v1394 = vsub.s32 5, %v1393
        %v1395 = vrot.slane %v1370, %v1394
        %v1396 = vlaneseq
        %v1397 = vshrl.u32 %v1396, 7
        %v1398 = vsub.s32 6, %v1397
        %v1399 = vrot.slane %v1370, %v1398
        %v1535 = vunpack.c.l.b16 %v1242
        %v1536 = vunpack.c.h.b16 %v1242
        %v1537 = vunpack.c.l.b16 %v1243
        %v1538 = vunpack.c.h.b16 %v1243
        %v1539 = vunpack.c.l.b16 %v1244
        %v1540 = vunpack.c.h.b16 %v1244
        %v1541 = vunpack.c.l.b16 %v1245
        %v1542 = vunpack.c.l.b16 %v1246
        %v1543 = vunpack.c.h.b16 %v1246
        %v1544 = vunpack.c.l.b16 %v1247
        %v1545 = vunpack.c.h.b16 %v1247
        %v1546 = vunpack.c.l.b16 %v1248
        %v1547 = vunpack.c.h.b16 %v1248
        %v1548 = vunpack.c.l.b16 %v1249
        %v1549 = vunpack.c.l.b16 %v1250
        %v1550 = vunpack.c.h.b16 %v1250
        %v1551 = vunpack.c.l.b16 %v1251
        %v1552 = vunpack.c.h.b16 %v1251
        %v1553 = vunpack.c.l.b16 %v1252
        %v1554 = vunpack.c.h.b16 %v1252
        %v1555 = vunpack.c.l.b16 %v1253
        %v1556 = vunpack.c.l.b16 %v1254
        %v1557 = vunpack.c.h.b16 %v1254
        %v1558 = vunpack.c.l.b16 %v1255
        %v1559 = vunpack.c.h.b16 %v1255
        %v1560 = vunpack.c.l.b16 %v1256
        %v1561 = vunpack.c.h.b16 %v1256
        %v1562 = vunpack.c.l.b16 %v1257
        %v1563 = vunpack.c.l.b16 %v1258
        %v1564 = vunpack.c.h.b16 %v1258
        %v1565 = vunpack.c.l.b16 %v1259
        %v1566 = vunpack.c.h.b16 %v1259
        %v1567 = vunpack.c.l.b16 %v1260
        %v1568 = vunpack.c.h.b16 %v1260
        %v1569 = vunpack.c.l.b16 %v1261
        %v1570 = vunpack.c.l.b16 %v1262
        %v1571 = vunpack.c.h.b16 %v1262
        %v1572 = vunpack.c.l.b16 %v1263
        %v1573 = vunpack.c.h.b16 %v1263
        %v1574 = vunpack.c.l.b16 %v1264
        %v1575 = vunpack.c.h.b16 %v1264
        %v1576 = vunpack.c.l.b16 %v1265
        %v1577 = vunpack.c.l.b16 %v1266
        %v1578 = vunpack.c.h.b16 %v1266
        %v1579 = vunpack.c.l.b16 %v1267
        %v1580 = vunpack.c.h.b16 %v1267
        %v1581 = vunpack.c.l.b16 %v1268
        %v1582 = vunpack.c.h.b16 %v1268
        %v1583 = vunpack.c.l.b16 %v1269
        %v1584 = vunpack.c.l.b16 %v1270
        %v1585 = vunpack.c.h.b16 %v1270
        %v1586 = vunpack.c.l.b16 %v1271
        %v1587 = vunpack.c.h.b16 %v1271
        %v1588 = vunpack.c.l.b16 %v1272
        %v1589 = vunpack.c.h.b16 %v1272
        %v1590 = vunpack.c.l.b16 %v1273
        %v1591 = vunpack.c.l.b16 %v1274
        %v1592 = vunpack.c.h.b16 %v1274
        %v1593 = vunpack.c.l.b16 %v1275
        %v1594 = vunpack.c.h.b16 %v1275
        %v1595 = vunpack.c.l.b16 %v1276
        %v1596 = vunpack.c.h.b16 %v1276
        %v1597 = vunpack.c.l.b16 %v1277
        %v1598 = vunpack.c.l.b16 %v1278
        %v1599 = vunpack.c.h.b16 %v1278
        %v1600 = vunpack.c.l.b16 %v1279
        %v1601 = vunpack.c.h.b16 %v1279
        %v1602 = vunpack.c.l.b16 %v1280
        %v1603 = vunpack.c.h.b16 %v1280
        %v1604 = vunpack.c.l.b16 %v1281
        %v1605 = vunpack.c.l.b16 %v1282
        %v1606 = vunpack.c.h.b16 %v1282
        %v1607 = vunpack.c.l.b16 %v1283
        %v1608 = vunpack.c.h.b16 %v1283
        %v1609 = vunpack.c.l.b16 %v1284
        %v1610 = vunpack.c.h.b16 %v1284
        %v1611 = vunpack.c.l.b16 %v1285
        %v1612 = vunpack.c.l.b16 %v1286
        %v1613 = vunpack.c.h.b16 %v1286
        %v1614 = vunpack.c.l.b16 %v1287
        %v1615 = vunpack.c.h.b16 %v1287
        %v1616 = vunpack.c.l.b16 %v1288
        %v1617 = vunpack.c.h.b16 %v1288
        %v1618 = vunpack.c.l.b16 %v1289
        %v1619 = vunpack.c.l.b16 %v1290
        %v1620 = vunpack.c.h.b16 %v1290
        %v1621 = vunpack.c.l.b16 %v1291
        %v1622 = vunpack.c.h.b16 %v1291
        %v1623 = vunpack.c.l.b16 %v1292
        %v1624 = vunpack.c.h.b16 %v1292
        %v1625 = vunpack.c.l.b16 %v1293
        %v1626 = vunpack.c.l.b16 %v1294
        %v1627 = vunpack.c.h.b16 %v1294
        %v1628 = vunpack.c.l.b16 %v1295
        %v1629 = vunpack.c.h.b16 %v1295
        %v1630 = vunpack.c.l.b16 %v1296
        %v1631 = vunpack.c.h.b16 %v1296
        %v1632 = vunpack.c.l.b16 %v1297
        %v1633 = vunpack.c.l.b16 %v1298
        %v1634 = vunpack.c.h.b16 %v1298
        %v1635 = vunpack.c.l.b16 %v1299
        %v1636 = vunpack.c.h.b16 %v1299
        %v1637 = vunpack.c.l.b16 %v1300
        %v1638 = vunpack.c.h.b16 %v1300
        %v1639 = vunpack.c.l.b16 %v1301
        %v1640 = vunpack.c.l.b16 %v1302
        %v1641 = vunpack.c.h.b16 %v1302
        %v1642 = vunpack.c.l.b16 %v1303
        %v1643 = vunpack.c.h.b16 %v1303
        %v1644 = vunpack.c.l.b16 %v1304
        %v1645 = vunpack.c.h.b16 %v1304
        %v1646 = vunpack.c.l.b16 %v1305
        %v1647 = vunpack.c.l.b16 %v1306
        %v1648 = vunpack.c.h.b16 %v1306
        %v1649 = vunpack.c.l.b16 %v1307
        %v1650 = vunpack.c.h.b16 %v1307
        %v1651 = vunpack.c.l.b16 %v1308
        %v1652 = vunpack.c.h.b16 %v1308
        %v1653 = vunpack.c.l.b16 %v1309
        %v1654 = vunpack.c.l.b16 %v1310
        %v1655 = vunpack.c.h.b16 %v1310
        %v1656 = vunpack.c.l.b16 %v1311
        %v1657 = vunpack.c.h.b16 %v1311
        %v1658 = vunpack.c.l.b16 %v1312
        %v1659 = vunpack.c.h.b16 %v1312
        %v1660 = vunpack.c.l.b16 %v1313
        %v1661 = vunpack.c.l.b16 %v1314
        %v1662 = vunpack.c.h.b16 %v1314
        %v1663 = vunpack.c.l.b16 %v1315
        %v1664 = vunpack.c.h.b16 %v1315
        %v1665 = vunpack.c.l.b16 %v1316
        %v1666 = vunpack.c.h.b16 %v1316
        %v1667 = vunpack.c.l.b16 %v1317
        %v1668 = vunpack.c.l.b16 %v1318
        %v1669 = vunpack.c.h.b16 %v1318
        %v1670 = vunpack.c.l.b16 %v1319
        %v1671 = vunpack.c.h.b16 %v1319
        %v1672 = vunpack.c.l.b16 %v1320
        %v1673 = vunpack.c.h.b16 %v1320
        %v1674 = vunpack.c.l.b16 %v1321
        %v1675 = vunpack.c.l.b16 %v1322
        %v1676 = vunpack.c.h.b16 %v1322
        %v1677 = vunpack.c.l.b16 %v1323
        %v1678 = vunpack.c.h.b16 %v1323
        %v1679 = vunpack.c.l.b16 %v1324
        %v1680 = vunpack.c.h.b16 %v1324
        %v1681 = vunpack.c.l.b16 %v1325
        %v1682 = vunpack.c.l.b16 %v1326
        %v1683 = vunpack.c.h.b16 %v1326
        %v1684 = vunpack.c.l.b16 %v1327
        %v1685 = vunpack.c.h.b16 %v1327
        %v1686 = vunpack.c.l.b16 %v1328
        %v1687 = vunpack.c.h.b16 %v1328
        %v1688 = vunpack.c.l.b16 %v1329
        %v1689 = vunpack.c.l.b16 %v1330
        %v1690 = vunpack.c.h.b16 %v1330
        %v1691 = vunpack.c.l.b16 %v1331
        %v1692 = vunpack.c.h.b16 %v1331
        %v1693 = vunpack.c.l.b16 %v1332
        %v1694 = vunpack.c.h.b16 %v1332
        %v1695 = vunpack.c.l.b16 %v1333
        %v1696 = vunpack.c.l.b16 %v1334
        %v1697 = vunpack.c.h.b16 %v1334
        %v1698 = vunpack.c.l.b16 %v1335
        %v1699 = vunpack.c.h.b16 %v1335
        %v1700 = vunpack.c.l.b16 %v1336
        %v1701 = vunpack.c.h.b16 %v1336
        %v1702 = vunpack.c.l.b16 %v1337
        %v1703 = vunpack.c.l.b16 %v1338
        %v1704 = vunpack.c.h.b16 %v1338
        %v1705 = vunpack.c.l.b16 %v1339
        %v1706 = vunpack.c.h.b16 %v1339
        %v1707 = vunpack.c.l.b16 %v1340
        %v1708 = vunpack.c.h.b16 %v1340
        %v1709 = vunpack.c.l.b16 %v1341
        %v1710 = vunpack.c.l.b16 %v1342
        %v1711 = vunpack.c.h.b16 %v1342
        %v1712 = vunpack.c.l.b16 %v1343
        %v1713 = vunpack.c.h.b16 %v1343
        %v1714 = vunpack.c.l.b16 %v1344
        %v1715 = vunpack.c.h.b16 %v1344
        %v1716 = vunpack.c.l.b16 %v1345
        %v1717 = vunpack.c.l.b16 %v1346
        %v1718 = vunpack.c.h.b16 %v1346
        %v1719 = vunpack.c.l.b16 %v1347
        %v1720 = vunpack.c.h.b16 %v1347
        %v1721 = vunpack.c.l.b16 %v1348
        %v1722 = vunpack.c.h.b16 %v1348
        %v1723 = vunpack.c.l.b16 %v1349
        %v1724 = vunpack.c.l.b16 %v1350
        %v1725 = vunpack.c.h.b16 %v1350
        %v1726 = vunpack.c.l.b16 %v1351
        %v1727 = vunpack.c.h.b16 %v1351
        %v1728 = vunpack.c.l.b16 %v1352
        %v1729 = vunpack.c.h.b16 %v1352
        %v1730 = vunpack.c.l.b16 %v1353
        %v1731 = vunpack.c.l.b16 %v1354
        %v1732 = vunpack.c.h.b16 %v1354
        %v1733 = vunpack.c.l.b16 %v1355
        %v1734 = vunpack.c.h.b16 %v1355
        %v1735 = vunpack.c.l.b16 %v1356
        %v1736 = vunpack.c.h.b16 %v1356
        %v1737 = vunpack.c.l.b16 %v1357
        %v1738 = vunpack.c.l.b16 %v1358
        %v1739 = vunpack.c.h.b16 %v1358
        %v1740 = vunpack.c.l.b16 %v1359
        %v1741 = vunpack.c.h.b16 %v1359
        %v1742 = vunpack.c.l.b16 %v1360
        %v1743 = vunpack.c.h.b16 %v1360
        %v1744 = vunpack.c.l.b16 %v1361
        %v1745 = vunpack.c.l.b16 %v1362
        %v1746 = vunpack.c.h.b16 %v1362
        %v1747 = vunpack.c.l.b16 %v1363
        %v1748 = vunpack.c.h.b16 %v1363
        %v1749 = vunpack.c.l.b16 %v1364
        %v1750 = vunpack.c.h.b16 %v1364
        %v1751 = vunpack.c.l.b16 %v1365
        %v1752 = vunpack.c.l.b16 %v1366
        %v1753 = vunpack.c.h.b16 %v1366
        %v1754 = vunpack.c.l.b16 %v1367
        %v1755 = vunpack.c.h.b16 %v1367
        %v1756 = vunpack.c.l.b16 %v1368
        %v1757 = vunpack.c.h.b16 %v1368
        %v1758 = vunpack.c.l.b16 %v1369
        %v1759 = vpack.c.b16 %v1542, %v1535
        %v1760 = vpack.c.b16 %v1543, %v1536
        %v1761 = vpack.c.b16 %v1544, %v1537
        %v1762 = vpack.c.b16 %v1545, %v1538
        %v1763 = vpack.c.b16 %v1546, %v1539
        %v1764 = vpack.c.b16 %v1547, %v1540
        %v1765 = vpack.c.b16 %v1548, %v1541
        %v1766 = vpack.c.b16 %v1556, %v1549
        %v1767 = vpack.c.b16 %v1557, %v1550
        %v1768 = vpack.c.b16 %v1558, %v1551
        %v1769 = vpack.c.b16 %v1559, %v1552
        %v1770 = vpack.c.b16 %v1560, %v1553
        %v1771 = vpack.c.b16 %v1561, %v1554
        %v1772 = vpack.c.b16 %v1562, %v1555
        %v1773 = vpack.c.b16 %v1570, %v1563
        %v1774 = vpack.c.b16 %v1571, %v1564
        %v1775 = vpack.c.b16 %v1572, %v1565
        %v1776 = vpack.c.b16 %v1573, %v1566
        %v1777 = vpack.c.b16 %v1574, %v1567
        %v1778 = vpack.c.b16 %v1575, %v1568
        %v1779 = vpack.c.b16 %v1576, %v1569
        %v1780 = vpack.c.b16 %v1584, %v1577
        %v1781 = vpack.c.b16 %v1585, %v1578
        %v1782 = vpack.c.b16 %v1586, %v1579
        %v1783 = vpack.c.b16 %v1587, %v1580
        %v1784 = vpack.c.b16 %v1588, %v1581
        %v1785 = vpack.c.b16 %v1589, %v1582
        %v1786 = vpack.c.b16 %v1590, %v1583
        %v1787 = vpack.c.b16 %v1598, %v1591
        %v1788 = vpack.c.b16 %v1599, %v1592
        %v1789 = vpack.c.b16 %v1600, %v1593
        %v1790 = vpack.c.b16 %v1601, %v1594
        %v1791 = vpack.c.b16 %v1602, %v1595
        %v1792 = vpack.c.b16 %v1603, %v1596
        %v1793 = vpack.c.b16 %v1604, %v1597
        %v1794 = vpack.c.b16 %v1612, %v1605
        %v1795 = vpack.c.b16 %v1613, %v1606
        %v1796 = vpack.c.b16 %v1614, %v1607
        %v1797 = vpack.c.b16 %v1615, %v1608
        %v1798 = vpack.c.b16 %v1616, %v1609
        %v1799 = vpack.c.b16 %v1617, %v1610
        %v1800 = vpack.c.b16 %v1618, %v1611
        %v1801 = vpack.c.b16 %v1626, %v1619
        %v1802 = vpack.c.b16 %v1627, %v1620
        %v1803 = vpack.c.b16 %v1628, %v1621
        %v1804 = vpack.c.b16 %v1629, %v1622
        %v1805 = vpack.c.b16 %v1630, %v1623
        %v1806 = vpack.c.b16 %v1631, %v1624
        %v1807 = vpack.c.b16 %v1632, %v1625
        %v1808 = vpack.c.b16 %v1640, %v1633
        %v1809 = vpack.c.b16 %v1641, %v1634
        %v1810 = vpack.c.b16 %v1642, %v1635
        %v1811 = vpack.c.b16 %v1643, %v1636
        %v1812 = vpack.c.b16 %v1644, %v1637
        %v1813 = vpack.c.b16 %v1645, %v1638
        %v1814 = vpack.c.b16 %v1646, %v1639
        %v1815 = vpack.c.b16 %v1654, %v1647
        %v1816 = vpack.c.b16 %v1655, %v1648
        %v1817 = vpack.c.b16 %v1656, %v1649
        %v1818 = vpack.c.b16 %v1657, %v1650
        %v1819 = vpack.c.b16 %v1658, %v1651
        %v1820 = vpack.c.b16 %v1659, %v1652
        %v1821 = vpack.c.b16 %v1660, %v1653
        %v1822 = vpack.c.b16 %v1668, %v1661
        %v1823 = vpack.c.b16 %v1669, %v1662
        %v1824 = vpack.c.b16 %v1670, %v1663
        %v1825 = vpack.c.b16 %v1671, %v1664
        %v1826 = vpack.c.b16 %v1672, %v1665
        %v1827 = vpack.c.b16 %v1673, %v1666
        %v1828 = vpack.c.b16 %v1674, %v1667
        %v1829 = vpack.c.b16 %v1682, %v1675
        %v1830 = vpack.c.b16 %v1683, %v1676
        %v1831 = vpack.c.b16 %v1684, %v1677
        %v1832 = vpack.c.b16 %v1685, %v1678
        %v1833 = vpack.c.b16 %v1686, %v1679
        %v1834 = vpack.c.b16 %v1687, %v1680
        %v1835 = vpack.c.b16 %v1688, %v1681
        %v1836 = vpack.c.b16 %v1696, %v1689
        %v1837 = vpack.c.b16 %v1697, %v1690
        %v1838 = vpack.c.b16 %v1698, %v1691
        %v1839 = vpack.c.b16 %v1699, %v1692
        %v1840 = vpack.c.b16 %v1700, %v1693
        %v1841 = vpack.c.b16 %v1701, %v1694
        %v1842 = vpack.c.b16 %v1702, %v1695
        %v1843 = vpack.c.b16 %v1710, %v1703
        %v1844 = vpack.c.b16 %v1711, %v1704
        %v1845 = vpack.c.b16 %v1712, %v1705
        %v1846 = vpack.c.b16 %v1713, %v1706
        %v1847 = vpack.c.b16 %v1714, %v1707
        %v1848 = vpack.c.b16 %v1715, %v1708
        %v1849 = vpack.c.b16 %v1716, %v1709
        %v1850 = vpack.c.b16 %v1724, %v1717
        %v1851 = vpack.c.b16 %v1725, %v1718
        %v1852 = vpack.c.b16 %v1726, %v1719
        %v1853 = vpack.c.b16 %v1727, %v1720
        %v1854 = vpack.c.b16 %v1728, %v1721
        %v1855 = vpack.c.b16 %v1729, %v1722
        %v1856 = vpack.c.b16 %v1730, %v1723
        %v1857 = vpack.c.b16 %v1738, %v1731
        %v1858 = vpack.c.b16 %v1739, %v1732
        %v1859 = vpack.c.b16 %v1740, %v1733
        %v1860 = vpack.c.b16 %v1741, %v1734
        %v1861 = vpack.c.b16 %v1742, %v1735
        %v1862 = vpack.c.b16 %v1743, %v1736
        %v1863 = vpack.c.b16 %v1744, %v1737
        %v1864 = vpack.c.b16 %v1752, %v1745
        %v1865 = vpack.c.b16 %v1753, %v1746
        %v1866 = vpack.c.b16 %v1754, %v1747
        %v1867 = vpack.c.b16 %v1755, %v1748
        %v1868 = vpack.c.b16 %v1756, %v1749
        %v1869 = vpack.c.b16 %v1757, %v1750
        %v1870 = vpack.c.b16 %v1758, %v1751
        %1983 = vmatprep.subr.bf16.mxu0 %v1760
        %1984 = vmatpush1.bf16.msra.mxu0 %v1759
        %1985 = vmatprep.subr.bf16.mxu0 %v1767
        %1986 = vmatpush1.bf16.msra.mxu0 %v1766
        %1987 = vmatprep.subr.bf16.mxu0 %v1774
        %1988 = vmatpush1.bf16.msra.mxu0 %v1773
        %1989 = vmatprep.subr.bf16.mxu0 %v1781
        %1990 = vmatpush1.bf16.msra.mxu0 %v1780
        %1991 = vmatprep.subr.bf16.mxu0 %v1788
        %1992 = vmatpush1.bf16.msra.mxu0 %v1787
        %1993 = vmatprep.subr.bf16.mxu0 %v1795
        %1994 = vmatpush1.bf16.msra.mxu0 %v1794
        %1995 = vmatprep.subr.bf16.mxu0 %v1802
        %1996 = vmatpush1.bf16.msra.mxu0 %v1801
        %1997 = vmatprep.subr.bf16.mxu0 %v1809
        %1998 = vmatpush1.bf16.msra.mxu0 %v1808
        %1999 = vmatprep.subr.bf16.mxu0 %v1816
        %2000 = vmatpush1.bf16.msra.mxu0 %v1815
        %2001 = vmatprep.subr.bf16.mxu0 %v1823
        %2002 = vmatpush1.bf16.msra.mxu0 %v1822
        %2003 = vmatprep.subr.bf16.mxu0 %v1830
        %2004 = vmatpush1.bf16.msra.mxu0 %v1829
        %2005 = vmatprep.subr.bf16.mxu0 %v1837
        %2006 = vmatpush1.bf16.msra.mxu0 %v1836
        %2007 = vmatprep.subr.bf16.mxu0 %v1844
        %2008 = vmatpush1.bf16.msra.mxu0 %v1843
        %2009 = vmatprep.subr.bf16.mxu0 %v1851
        %2010 = vmatpush1.bf16.msra.mxu0 %v1850
        %2011 = vmatprep.subr.bf16.mxu0 %v1858
        %2012 = vmatpush1.bf16.msra.mxu0 %v1857
        %2013 = vmatprep.subr.bf16.mxu0 %v1865
        %2014 = vmatpush1.bf16.msra.mxu0 %v1864
        %2015 = vmatprep.mubr.bf16.mxu0 %v1241
        %2016 = vmatmul.mubr.bf16.gmra.mrb[0].mxu0 %v1240
        %v2017 = vpop.f32.mrb[0].mxu0
        %v2018 = vadd.f32 %v1375, %v2017
        %v2019 = vpop.f32.mrb[0].mxu0
        %v2020 = vadd.f32 %v1379, %v2019
        %v2021 = vpop.f32.mrb[0].mxu0
        %v2022 = vpop.f32.mrb[0].mxu0
        %2023 = vdwg.mxu0
        %2024 = vmatprep.subr.bf16.mxu0 %v1762
        %2025 = vmatpush1.bf16.msra.mxu0 %v1761
        %2026 = vmatprep.subr.bf16.mxu0 %v1769
        %2027 = vmatpush1.bf16.msra.mxu0 %v1768
        %2028 = vmatprep.subr.bf16.mxu0 %v1776
        %2029 = vmatpush1.bf16.msra.mxu0 %v1775
        %2030 = vmatprep.subr.bf16.mxu0 %v1783
        %2031 = vmatpush1.bf16.msra.mxu0 %v1782
        %2032 = vmatprep.subr.bf16.mxu0 %v1790
        %2033 = vmatpush1.bf16.msra.mxu0 %v1789
        %2034 = vmatprep.subr.bf16.mxu0 %v1797
        %2035 = vmatpush1.bf16.msra.mxu0 %v1796
        %2036 = vmatprep.subr.bf16.mxu0 %v1804
        %2037 = vmatpush1.bf16.msra.mxu0 %v1803
        %2038 = vmatprep.subr.bf16.mxu0 %v1811
        %2039 = vmatpush1.bf16.msra.mxu0 %v1810
        %2040 = vmatprep.subr.bf16.mxu0 %v1818
        %2041 = vmatpush1.bf16.msra.mxu0 %v1817
        %2042 = vmatprep.subr.bf16.mxu0 %v1825
        %2043 = vmatpush1.bf16.msra.mxu0 %v1824
        %2044 = vmatprep.subr.bf16.mxu0 %v1832
        %2045 = vmatpush1.bf16.msra.mxu0 %v1831
        %2046 = vmatprep.subr.bf16.mxu0 %v1839
        %2047 = vmatpush1.bf16.msra.mxu0 %v1838
        %2048 = vmatprep.subr.bf16.mxu0 %v1846
        %2049 = vmatpush1.bf16.msra.mxu0 %v1845
        %2050 = vmatprep.subr.bf16.mxu0 %v1853
        %2051 = vmatpush1.bf16.msra.mxu0 %v1852
        %2052 = vmatprep.subr.bf16.mxu0 %v1860
        %2053 = vmatpush1.bf16.msra.mxu0 %v1859
        %2054 = vmatprep.subr.bf16.mxu0 %v1867
        %2055 = vmatpush1.bf16.msra.mxu0 %v1866
        %2056 = vmatprep.mubr.bf16.mxu0 %v1241
        %2057 = vmatmul.mubr.bf16.gmra.mrb[0].mxu0 %v1240
        %v2058 = vpop.f32.mrb[0].mxu0
        %v2059 = vadd.f32 %v1383, %v2058
        %v2060 = vpop.f32.mrb[0].mxu0
        %v2061 = vadd.f32 %v1387, %v2060
        %v2062 = vpop.f32.mrb[0].mxu0
        %v2063 = vpop.f32.mrb[0].mxu0
        %2064 = vdwg.mxu0
        %2065 = vmatprep.subr.bf16.mxu0 %v1764
        %2066 = vmatpush1.bf16.msra.mxu0 %v1763
        %2067 = vmatprep.subr.bf16.mxu0 %v1771
        %2068 = vmatpush1.bf16.msra.mxu0 %v1770
        %2069 = vmatprep.subr.bf16.mxu0 %v1778
        %2070 = vmatpush1.bf16.msra.mxu0 %v1777
        %2071 = vmatprep.subr.bf16.mxu0 %v1785
        %2072 = vmatpush1.bf16.msra.mxu0 %v1784
        %2073 = vmatprep.subr.bf16.mxu0 %v1792
        %2074 = vmatpush1.bf16.msra.mxu0 %v1791
        %2075 = vmatprep.subr.bf16.mxu0 %v1799
        %2076 = vmatpush1.bf16.msra.mxu0 %v1798
        %2077 = vmatprep.subr.bf16.mxu0 %v1806
        %2078 = vmatpush1.bf16.msra.mxu0 %v1805
        %2079 = vmatprep.subr.bf16.mxu0 %v1813
        %2080 = vmatpush1.bf16.msra.mxu0 %v1812
        %2081 = vmatprep.subr.bf16.mxu0 %v1820
        %2082 = vmatpush1.bf16.msra.mxu0 %v1819
        %2083 = vmatprep.subr.bf16.mxu0 %v1827
        %2084 = vmatpush1.bf16.msra.mxu0 %v1826
        %2085 = vmatprep.subr.bf16.mxu0 %v1834
        %2086 = vmatpush1.bf16.msra.mxu0 %v1833
        %2087 = vmatprep.subr.bf16.mxu0 %v1841
        %2088 = vmatpush1.bf16.msra.mxu0 %v1840
        %2089 = vmatprep.subr.bf16.mxu0 %v1848
        %2090 = vmatpush1.bf16.msra.mxu0 %v1847
        %2091 = vmatprep.subr.bf16.mxu0 %v1855
        %2092 = vmatpush1.bf16.msra.mxu0 %v1854
        %2093 = vmatprep.subr.bf16.mxu0 %v1862
        %2094 = vmatpush1.bf16.msra.mxu0 %v1861
        %2095 = vmatprep.subr.bf16.mxu0 %v1869
        %2096 = vmatpush1.bf16.msra.mxu0 %v1868
        %2097 = vmatprep.mubr.bf16.mxu0 %v1241
        %2098 = vmatmul.mubr.bf16.gmra.mrb[0].mxu0 %v1240
        %v2099 = vpop.f32.mrb[0].mxu0
        %v2100 = vadd.f32 %v1391, %v2099
        %v2101 = vpop.f32.mrb[0].mxu0
        %v2102 = vadd.f32 %v1395, %v2101
        %v2103 = vpop.f32.mrb[0].mxu0
        %v2104 = vpop.f32.mrb[0].mxu0
        %2105 = vdwg.mxu0
        %2106 = vmatprep.subr.bf16.mxu0 0
        %2107 = vmatpush1.bf16.msra.mxu0 %v1765
        %2108 = vmatprep.subr.bf16.mxu0 0
        %2109 = vmatpush1.bf16.msra.mxu0 %v1772
        %2110 = vmatprep.subr.bf16.mxu0 0
        %2111 = vmatpush1.bf16.msra.mxu0 %v1779
        %2112 = vmatprep.subr.bf16.mxu0 0
        %2113 = vmatpush1.bf16.msra.mxu0 %v1786
        %2114 = vmatprep.subr.bf16.mxu0 0
        %2115 = vmatpush1.bf16.msra.mxu0 %v1793
        %2116 = vmatprep.subr.bf16.mxu0 0
        %2117 = vmatpush1.bf16.msra.mxu0 %v1800
        %2118 = vmatprep.subr.bf16.mxu0 0
        %2119 = vmatpush1.bf16.msra.mxu0 %v1807
        %2120 = vmatprep.subr.bf16.mxu0 0
        %2121 = vmatpush1.bf16.msra.mxu0 %v1814
        %2122 = vmatprep.subr.bf16.mxu0 0
        %2123 = vmatpush1.bf16.msra.mxu0 %v1821
        %2124 = vmatprep.subr.bf16.mxu0 0
        %2125 = vmatpush1.bf16.msra.mxu0 %v1828
        %2126 = vmatprep.subr.bf16.mxu0 0
        %2127 = vmatpush1.bf16.msra.mxu0 %v1835
        %2128 = vmatprep.subr.bf16.mxu0 0
        %2129 = vmatpush1.bf16.msra.mxu0 %v1842
        %2130 = vmatprep.subr.bf16.mxu0 0
        %2131 = vmatpush1.bf16.msra.mxu0 %v1849
        %2132 = vmatprep.subr.bf16.mxu0 0
        %2133 = vmatpush1.bf16.msra.mxu0 %v1856
        %2134 = vmatprep.subr.bf16.mxu0 0
        %2135 = vmatpush1.bf16.msra.mxu0 %v1863
        %2136 = vmatprep.subr.bf16.mxu0 0
        %2137 = vmatpush1.bf16.msra.mxu0 %v1870
        %2138 = vmatprep.mubr.bf16.mxu0 %v1241
        %2139 = vmatmul.mubr.bf16.gmra.mrb[0].mxu0 %v1240
        %v2140 = vpop.f32.mrb[0].mxu0
        %v2141 = vadd.f32 %v1399, %v2140
        %v2142 = vpop.f32.mrb[0].mxu0
        %v2143 = vpop.f32.mrb[0].mxu0
        %v2144 = vpop.f32.mrb[0].mxu0
        %2145 = vdwg.mxu0
        %2146 = vst [vmem:[#allocation2] sm:$0xff] %v2018
        %2147 = vst [vmem:[#allocation2 + $0x8] sm:$0xff] %v2020
        %2148 = vst [vmem:[#allocation2 + $0x10] sm:$0xff] %v2059
        %2149 = vst [vmem:[#allocation2 + $0x18] sm:$0xff] %v2061
        %2150 = vst [vmem:[#allocation2 + $0x20] sm:$0xff] %v2100
        %2151 = vst [vmem:[#allocation2 + $0x28] sm:$0xff] %v2102
        %2152 = vst [vmem:[#allocation2 + $0x30] sm:$0xff] %v2141
        %p2153 = scmp.eq.s32.totalorder %s29, 1
        // Predicated region
        $region61: #{sequential_layers_forward.1} parent=47 // pred_check
          %p2154 = pneg %p2153
        $region62: #{sequential_layers_forward.1} parent=47 // pred_check_branch
          %2156 = sbr.rel (%p2154) target = $region64
        $region63: #{sequential_layers_forward.1} parent=47 // pred_region
          %2157 = vst [vmem:[%s438] sm:$0xff] %v2018
          %2158 = vst [vmem:[%s438 + $0x8] sm:$0xff] %v2020
          %2159 = vst [vmem:[%s438 + $0x10] sm:$0xff] %v2059
          %2160 = vst [vmem:[%s438 + $0x18] sm:$0xff] %v2061
          %2161 = vst [vmem:[%s438 + $0x20] sm:$0xff] %v2100
          %2162 = vst [vmem:[%s438 + $0x28] sm:$0xff] %v2102
          %2163 = vst [vmem:[%s438 + $0x30] sm:$0xff] %v2141
        $region64: #{sequential_layers_forward.1} parent=47 // pred_fallthru
          _
        %p2164 = scmp.lt.s32.totalorder %s28, 1
        %s2165 = scalar_select %p2164, %s28, 1
        %s2166 = smul.addr %s2165, 7
        %s2167 = smul.addr %s2166, 8
        %s2168 = scalar_lea.vmem %s7, %s2167
        // Predicated region
        $region65: #{sequential_layers_forward.1} parent=47 // pred_check
          %p2169 = pneg %p236
        $region66: #{sequential_layers_forward.1} parent=47 // pred_check_branch
          %2171 = sbr.rel (%p2169) target = $region68
        $region67: #{sequential_layers_forward.1} parent=47 // pred_region
          _
        $region68: #{sequential_layers_forward.1} parent=47 // pred_fallthru
          _
      $region48: #{sequential_layers_forward.1} parent=5 // pred_fallthru
        _
      %p2172 = scmp.le.s32.totalorder 2, %s19
      // Predicated region
      $region69: #{sequential_layers_forward.1} parent=5 // pred_check
        %p2173 = pneg %p2172
      $region70: #{sequential_layers_forward.1} parent=5 // pred_check_branch
        %2175 = sbr.rel (%p2173) target = $region72
      $region71: #{sequential_layers_forward.1} parent=5 // pred_region
        %s2176 = ssub.s32 %s19, 2
        // Predicated region
        $region73: #{sequential_layers_forward.1} parent=71 // pred_check
          %p2177 = pneg %p242
        $region74: #{sequential_layers_forward.1} parent=71 // pred_check_branch
          %2179 = sbr.rel (%p2177) target = $region76
        $region75: #{sequential_layers_forward.1} parent=71 // pred_region
          %p2180 = scmp.lt.s32.totalorder %s30, 1
          %s2181 = scalar_select %p2180, %s30, 1
          %s2182 = smul.addr %s2181, 7
          %s2183 = smul.addr %s2182, 8
          %s2184 = scalar_lea.vmem %s7, %s2183
        $region76: #{sequential_layers_forward.1} parent=71 // pred_fallthru
          _
      $region72: #{sequential_layers_forward.1} parent=5 // pred_fallthru
        _
    $region6: #{sequential_layers_forward.1} parent=1 // loop_footer
      %s23 = sadd.s32 1, %s19
    $region7: #{sequential_layers_forward.1} parent=1 // loop_footer_branch
      %18 = sbr.rel target = $region3
    $region8: #{sequential_layers_forward.1} parent=1 // loop_exit
      _
    %2185 = vsyncpa [#allocation4], 1
    %s2186 = scalar_lea.sflag [#allocation4], 1
    %2187 = vsyncpa %s2186, 1
    %2188 = vsyncpa [#allocation6], 1
    %s2189 = scalar_lea.sflag [#allocation6], 1
    %2190 = vsyncpa %s2189, 1

</llo_original>
